<compile_context>
chip_gen: v7x
topology: tpu7x:2x2x1
jax: 0.10.0
libtpu: 0.0.40
codegen_flags: <defaults>
</compile_context>

<pallas_src>
import functools
import math

import jax
import jax.numpy as jnp
from jax.experimental import pallas as pl
from jax.experimental.pallas import tpu as pltpu

LN_EPS = 1e-5  # PyTorch nn.LayerNorm default


def _layernorm(x, gamma, beta):
    mu = jnp.mean(x, axis=-1, keepdims=True)
    var = jnp.mean((x - mu) ** 2, axis=-1, keepdims=True)
    return (x - mu) * jax.lax.rsqrt(var + LN_EPS) * gamma + beta


# ----------------------------------------------------------------------------------
# Kernel
# ----------------------------------------------------------------------------------
def transformer_block_kernel(x_ref, xh_ref, mask_ref,
                             wqkv_ref, wo_ref, bo_ref,
                             g1_ref, be1_ref,
                             w1_ref, bf1_ref,
                             w2_ref, bf2_ref,
                             g2_ref, be2_ref,
                             out_ref,
                             q_scr, k_scr, v_scr, ctx_scr,
                             *, heads, head_dim, embed_size, seq_len,
                             block_q, block_kv):
    H, D, E, S = heads, head_dim, embed_size, seq_len
    TQ, TKV = block_q, block_kv
    num_kv = S // TKV
    f32, bf16 = jnp.float32, jnp.bfloat16
    # NOTE: the reference module scales by 1/sqrt(embed_size), not 1/sqrt(head_dim).
    inv_sqrt_e = 1.0 / math.sqrt(E)
    neg_fill = -1e20 * inv_sqrt_e  # masked_fill(-1e20) followed by the /sqrt(E)

    # --- fused QKV projection, once per batch element (first q step only) ---------
    # One (H*S, D) @ (D, 3D) matmul (big M, weight-stationary, shared RHS).  The
    # per-head Python loop below is layout scatter only (static stores to scratch).
    @pl.when(pl.program_id(1) == 0)
    def _():
        qkv = jnp.dot(xh_ref[0], wqkv_ref[...], preferred_element_type=f32)  # (H*S,3D)
        for h in range(H):
            blk = qkv[h * S:(h + 1) * S]
            q_scr[h] = (blk[:, :D] * inv_sqrt_e).astype(bf16)  # scale folded into q
            k_scr[h] = blk[:, D:2 * D].astype(bf16)
            v_scr[h] = blk[:, 2 * D:].astype(bf16)

    qi = pl.multiple_of(pl.program_id(1) * TQ, TQ)
    q_bf = q_scr[:, pl.ds(qi, TQ), :]                                    # (H, TQ, D)

    if num_kv == 1:
        # Single-KV-tile path: plain softmax, normalization deferred to ctx.
        bias = jnp.where(mask_ref[0] == 0.0, neg_fill, 0.0)              # (1, S)
        s = jnp.einsum('hqd,hkd->hqk', q_bf, k_scr[...],
                       preferred_element_type=f32) + bias                # (H, TQ, S)
        m = jnp.max(s, axis=-1, keepdims=True)
        p = jnp.exp(s - m)
        denom = jnp.sum(p, axis=-1, keepdims=True)
        ctx = jnp.einsum('hqk,hkd->hqd', p.astype(bf16), v_scr[...],
                         preferred_element_type=f32)
        ctx = ctx * pl.reciprocal(denom, approx=True)                    # (H, TQ, D)
    else:
        # KV-tiled flash-style online softmax; intermediates bounded to (H, TQ, TKV).
        def kv_step(t, carry):
            m_i, l_i, acc = carry
            ki = pl.multiple_of(t * TKV, TKV)
            k_t = k_scr[:, pl.ds(ki, TKV), :]
            v_t = v_scr[:, pl.ds(ki, TKV), :]
            bias_t = jnp.where(mask_ref[0, :, pl.ds(ki, TKV)] == 0.0, neg_fill, 0.0)
            s = jnp.einsum('hqd,hkd->hqk', q_bf, k_t,
                           preferred_element_type=f32) + bias_t
            m_new = jnp.maximum(m_i, jnp.max(s, axis=-1, keepdims=True))
            alpha = jnp.exp(m_i - m_new)
            p = jnp.exp(s - m_new)
            l_new = alpha * l_i + jnp.sum(p, axis=-1, keepdims=True)
            acc_new = alpha * acc + jnp.einsum('hqk,hkd->hqd', p.astype(bf16), v_t,
                                               preferred_element_type=f32)
            return m_new, l_new, acc_new

        carry0 = (jnp.full((H, TQ, 1), -jnp.inf, f32),
                  jnp.zeros((H, TQ, 1), f32),
                  jnp.zeros((H, TQ, D), f32))
        _, l_i, acc = jax.lax.fori_loop(0, num_kv, kv_step, carry0)
        ctx = acc * pl.reciprocal(l_i, approx=True)                      # (H, TQ, D)

    # --- output projection: scatter heads into a (TQ, E) tile (layout only), then
    # ONE K=E matmul (vs. H separate K=D matmuls + cross-head reduction).
    ctx_bf = ctx.astype(bf16)
    for h in range(H):
        ctx_scr[:, h * D:(h + 1) * D] = ctx_bf[h]
    att = jnp.dot(ctx_scr[...], wo_ref[...],
                  preferred_element_type=f32) + bo_ref[...]              # (TQ, E)

    # --- residual + norm1 (dropout == identity) ------------------------------------
    x_q = x_ref[0]                                                       # (TQ, E) f32
    x1 = _layernorm(att + x_q, g1_ref[...], be1_ref[...])

    # --- feed forward ---------------------------------------------------------------
    hidden = jnp.dot(x1.astype(bf16), w1_ref[...],
                     preferred_element_type=f32) + bf1_ref[...]
    hidden = jnp.maximum(hidden, 0.0)                                    # ReLU (f32)
    ff = jnp.dot(hidden.astype(bf16), w2_ref[...],
                 preferred_element_type=f32) + bf2_ref[...]

    # --- residual + norm2 (dropout == identity) -------------------------------------
    out_ref[0] = _layernorm(ff + x1, g2_ref[...], be2_ref[...])


# ----------------------------------------------------------------------------------
# Wrapper
# ----------------------------------------------------------------------------------
def _pick_tile(S):
    if S <= 512:
        return S
    for cand in (512, 256, 128):
        if S % cand == 0:
            return cand
    raise ValueError(
        f"seq_len={S}: pad the sequence to be <= 512 or divisible by 128 "
        "(required for (8,128)-aligned q/kv tiles).")


_BUFFERED_WEIGHTS_OK = None


def _weights_single_buffered():
    """Probe whether BlockSpec(pipeline_mode=pl.Buffered(1)) is supported (halves
    resident-weight VMEM, crucial on v7x's 64 MiB); fall back gracefully otherwise."""
    global _BUFFERED_WEIGHTS_OK
    if _BUFFERED_WEIGHTS_OK is not None:
        return _BUFFERED_WEIGHTS_OK
    try:
        def _k(x_ref, o_ref):
            o_ref[...] = x_ref[...] + 1.0

        x = jnp.zeros((8, 128), jnp.float32)
        y = pl.pallas_call(
            _k,
            out_shape=jax.ShapeDtypeStruct((8, 128), jnp.float32),
            grid=(2,),
            in_specs=[pl.BlockSpec((8, 128), lambda i: (0, 0),
                                   pipeline_mode=pl.Buffered(1))],
            out_specs=pl.BlockSpec((8, 128), lambda i: (0, 0)),
        )(x)
        jax.block_until_ready(y)
        _BUFFERED_WEIGHTS_OK = bool(jnp.all(y == 1.0))
    except Exception:
        _BUFFERED_WEIGHTS_OK = False
    return _BUFFERED_WEIGHTS_OK


@functools.lru_cache(maxsize=None)
def _vmem_limit_bytes():
    try:
        cap = int(pltpu.get_tpu_info().vmem_capacity_bytes)
    except Exception:
        cap = 128 * 1024 * 1024
    # Leave ~3/8 headroom for Mosaic internal scratch / spills (matters on v7x's
    # 64 MiB); cap so v5e/v6e (128 MiB) still get large tiles (~80 MiB declared).
    return min((cap * 5) // 8, 100 * 1024 * 1024)


def transformer_block(x, mask, pp, *, heads, block_q=None, block_kv=None):
    N, S, E = x.shape
    assert E % heads == 0
    D = E // heads
    FE = pp["w1_t"].shape[1]

    block_q = _pick_tile(S) if block_q is None else block_q
    block_kv = _pick_tile(S) if block_kv is None else block_kv
    assert S % block_q == 0 and S % block_kv == 0
    num_q = S // block_q

    # Layout plumbing only: head-major bf16 copy of x, flattened to (N, H*S, D) so the
    # kernel never needs a lane-dim reshape/transpose to split heads.  bf16 halves
    # this duplicate HBM stream; the f32 residual stream is q-tiled below.
    x_heads = (x.reshape(N, S, heads, D).transpose(0, 2, 1, 3)
               .reshape(N, heads * S, D).astype(jnp.bfloat16))
    mask3 = mask.reshape(N, 1, S).astype(jnp.float32)

    kernel = functools.partial(
        transformer_block_kernel, heads=heads, head_dim=D, embed_size=E,
        seq_len=S, block_q=block_q, block_kv=block_kv)

    wkw = {"pipeline_mode": pl.Buffered(1)} if _weights_single_buffered() else {}

    def const(shape):
        return pl.BlockSpec(shape, lambda n, q: (0,) * len(shape), **wkw)

    in_specs = [
        pl.BlockSpec((1, block_q, E), lambda n, q: (n, q, 0)),       # residual (q-tiled)
        pl.BlockSpec((1, heads * S, D), lambda n, q: (n, 0, 0)),     # head-major x (bf16)
        pl.BlockSpec((1, 1, S), lambda n, q: (n, 0, 0)),             # mask
        const((D, 3 * D)),                                           # fused Wqkv (bf16)
        const((E, E)),                                               # Wo (bf16)
        const((1, E)),                                               # bo
        const((1, E)), const((1, E)),                                # norm1 gamma/beta
        const((E, FE)), const((1, FE)),                              # W1 (bf16), b1
        const((FE, E)), const((1, E)),                               # W2 (bf16), b2
        const((1, E)), const((1, E)),                                # norm2 gamma/beta
    ]
    out_spec = pl.BlockSpec((1, block_q, E), lambda n, q: (n, q, 0))

    scratch_shapes = [
        pltpu.VMEM((heads, S, D), jnp.bfloat16),   # Q (pre-scaled)
        pltpu.VMEM((heads, S, D), jnp.bfloat16),   # K
        pltpu.VMEM((heads, S, D), jnp.bfloat16),   # V
        pltpu.VMEM((block_q, E), jnp.bfloat16),    # ctx head-concat tile
    ]

    return pl.pallas_call(
        kernel,
        out_shape=jax.ShapeDtypeStruct((N, S, E), jnp.float32),
        grid_spec=pltpu.PrefetchScalarGridSpec(
            num_scalar_prefetch=0,
            grid=(N, num_q),
            in_specs=in_specs,
            out_specs=out_spec,
            scratch_shapes=scratch_shapes,
        ),
        compiler_params=pltpu.CompilerParams(
            # K/V live in per-batch VMEM scratch -> q axis must run sequentially;
            # batch stays megacore-parallel.
            dimension_semantics=("parallel", "arbitrary"),
            vmem_limit_bytes=_vmem_limit_bytes(),
        ),
    )(x, x_heads, mask3,
      pp["wqkv_t"], pp["wo_t"], pp["bo"],
      pp["g1"], pp["be1"],
      pp["w1_t"], pp["bf1"],
      pp["w2_t"], pp["bf2"],
      pp["g2"], pp["be2"])


def pack_layer_params(p, heads):
    """PyTorch-style per-layer params -> kernel-ready fused / bf16 params."""
    bf = jnp.bfloat16
    return {
        "wqkv_t": jnp.concatenate([p["wq_t"], p["wk_t"], p["wv_t"]], axis=1).astype(bf),
        "wo_t": p["wo_t"].astype(bf),
        "bo": p["bo"],
        "g1": p["g1"], "be1": p["be1"],
        "w1_t": p["w1_t"].astype(bf), "bf1": p["bf1"],
        "w2_t": p["w2_t"].astype(bf), "bf2": p["bf2"],
        "g2": p["g2"], "be2": p["be2"],
    }


def encoder_forward(tokens, mask, word_emb, pos_emb, layer_params, *, heads,
                    block_q=None, block_kv=None):
    N, S = tokens.shape
    positions = jnp.arange(S)
    # Embedding gathers are data-dependent row gathers -> plain-JAX glue.
    out = word_emb[tokens] + pos_emb[positions][None, :, :]
    # dropout == identity (eval mode)
    for p in layer_params:
        out = transformer_block(out, mask, pack_layer_params(p, heads),
                                heads=heads, block_q=block_q, block_kv=block_kv)
    return out


# ----------------------------------------------------------------------------------
# Pure-JAX f32 reference (for a loose numerical sanity check)
# ----------------------------------------------------------------------------------
def encoder_reference(tokens, mask, word_emb, pos_emb, layer_params, *, heads):
    x = word_emb[tokens] + pos_emb[jnp.arange(tokens.shape[1])][None, :, :]
    for p in layer_params:
        N, S, E = x.shape
        D = E // heads
        xh = x.reshape(N, S, heads, D)
        q = xh @ p["wq_t"]
        k = xh @ p["wk_t"]
        v = xh @ p["wv_t"]
        energy = jnp.einsum('nqhd,nkhd->nhqk', q, k)
        energy = jnp.where(mask[:, None, None, :] == 0.0, -1e20, energy)
        attn = jax.nn.softmax(energy / math.sqrt(E), axis=-1)
        ctx = jnp.einsum('nhqk,nkhd->nqhd', attn, v).reshape(N, S, E)
        att = ctx @ p["wo_t"] + p["bo"]
        x1 = _layernorm(att + x, p["g1"], p["be1"])
        ff = jnp.maximum(x1 @ p["w1_t"] + p["bf1"], 0.0) @ p["w2_t"] + p["bf2"]
        x = _layernorm(ff + x1, p["g2"], p["be2"])
    return x


def init_layer_params(key, embed_size, heads, forward_expansion):
    D = embed_size // heads
    FE = forward_expansion * embed_size
    ks = jax.random.split(key, 8)
    scale = 0.05
    return {
        "wq_t": jax.random.normal(ks[0], (D, D), jnp.float32) * scale,
        "wk_t": jax.random.normal(ks[1], (D, D), jnp.float32) * scale,
        "wv_t": jax.random.normal(ks[2], (D, D), jnp.float32) * scale,
        "wo_t": jax.random.normal(ks[3], (embed_size, embed_size), jnp.float32) * scale,
        "bo":   jnp.zeros((1, embed_size), jnp.float32),
        "g1":   jnp.ones((1, embed_size), jnp.float32),
        "be1":  jnp.zeros((1, embed_size), jnp.float32),
        "w1_t": jax.random.normal(ks[4], (embed_size, FE), jnp.float32) * scale,
        "bf1":  jnp.zeros((1, FE), jnp.float32),
        "w2_t": jax.random.normal(ks[5], (FE, embed_size), jnp.float32) * scale,
        "bf2":  jnp.zeros((1, embed_size), jnp.float32),
        "g2":   jnp.ones((1, embed_size), jnp.float32),
        "be2":  jnp.zeros((1, embed_size), jnp.float32),
    }


if __name__ == "__main__":
    # Small shapes consistent with the module's forward.
    N, S = 2, 8
    src_vocab_size, max_len = 50, 16
    embed_size, heads, forward_expansion, num_layers = 32, 4, 4, 2

    key = jax.random.PRNGKey(0)
    k_word, k_pos, k_tok, k_layers = jax.random.split(key, 4)

    word_emb = jax.random.normal(k_word, (src_vocab_size, embed_size), jnp.float32) * 0.1
    pos_emb = jax.random.normal(k_pos, (max_len, embed_size), jnp.float32) * 0.1
    tokens = jax.random.randint(k_tok, (N, S), 0, src_vocab_size)
    # src mask: 1.0 = attend, 0.0 = masked (like (src != pad))
    mask = jnp.ones((N, S), jnp.float32).at[0, -1].set(0.0)

    layer_keys = jax.random.split(k_layers, num_layers)
    layer_params = [init_layer_params(k, embed_size, heads, forward_expansion)
                    for k in layer_keys]

    # Default path: single q tile, single KV tile.
    fwd = jax.jit(functools.partial(encoder_forward, heads=heads))
    out = fwd(tokens, mask, word_emb, pos_emb, layer_params)
    jax.block_until_ready(out)
    assert out.shape == (N, S, embed_size)
    ref = encoder_reference(tokens, mask, word_emb, pos_emb, layer_params, heads=heads)
    # bf16 matmul operands + approx reciprocal -> loose tolerance vs f32 reference.
    assert float(jnp.max(jnp.abs(out - ref))) < 1e-1

    # Exercise the q-tiled + KV-tiled (online-softmax) paths on a longer sequence.
    S2 = 16
    tokens2 = jax.random.randint(k_tok, (N, S2), 0, src_vocab_size)
    mask2 = jnp.ones((N, S2), jnp.float32).at[0, -2:].set(0.0)
    fwd2 = jax.jit(functools.partial(encoder_forward, heads=heads,
                                     block_q=8, block_kv=8))
    out2 = fwd2(tokens2, mask2, word_emb, pos_emb, layer_params)
    jax.block_until_ready(out2)
    assert out2.shape == (N, S2, embed_size)
    ref2 = encoder_reference(tokens2, mask2, word_emb, pos_emb, layer_params, heads=heads)
    assert float(jnp.max(jnp.abs(out2 - ref2))) < 1e-1

    print("KERNEL_OK")
</pallas_src>

<mosaic_0001>
module attributes {stable_mosaic.version = 11 : i64} {
  func.func @transformer_block_kernel(%arg0: i32, %arg1: i32, %arg2: memref<1x8x32xf32, #tpu.memory_space<vmem>>, %arg3: memref<1x32x8xbf16, #tpu.memory_space<vmem>>, %arg4: memref<1x1x8xf32, #tpu.memory_space<vmem>>, %arg5: memref<8x24xbf16, #tpu.memory_space<vmem>>, %arg6: memref<32x32xbf16, #tpu.memory_space<vmem>>, %arg7: memref<1x32xf32, #tpu.memory_space<vmem>>, %arg8: memref<1x32xf32, #tpu.memory_space<vmem>>, %arg9: memref<1x32xf32, #tpu.memory_space<vmem>>, %arg10: memref<32x128xbf16, #tpu.memory_space<vmem>>, %arg11: memref<1x128xf32, #tpu.memory_space<vmem>>, %arg12: memref<128x32xbf16, #tpu.memory_space<vmem>>, %arg13: memref<1x32xf32, #tpu.memory_space<vmem>>, %arg14: memref<1x32xf32, #tpu.memory_space<vmem>>, %arg15: memref<1x32xf32, #tpu.memory_space<vmem>>, %arg16: memref<1x8x32xf32, #tpu.memory_space<vmem>>, %arg17: memref<4x8x8xbf16, #tpu.memory_space<vmem>>, %arg18: memref<4x8x8xbf16, #tpu.memory_space<vmem>>, %arg19: memref<4x8x8xbf16, #tpu.memory_space<vmem>>, %arg20: memref<8x32xbf16, #tpu.memory_space<vmem>>) attributes {dimension_semantics = [#tpu.dimension_semantics<parallel>, #tpu.dimension_semantics<arbitrary>], iteration_bounds = array<i64: 2, 1>, scalar_prefetch = 0 : i64, scratch_operands = 4 : i64, tpu.core_type = #tpu.core_type<tc>, window_params = [{transform_indices = @transform_0, window_bounds = array<i64: 1, 8, 32>}, {transform_indices = @transform_1, window_bounds = array<i64: 1, 32, 8>}, {transform_indices = @transform_2, window_bounds = array<i64: 1, 1, 8>}, {pipeline_mode = #tpu.pipeline_mode<synchronous>, transform_indices = @transform_3, window_bounds = array<i64: 8, 24>}, {pipeline_mode = #tpu.pipeline_mode<synchronous>, transform_indices = @transform_4, window_bounds = array<i64: 32, 32>}, {pipeline_mode = #tpu.pipeline_mode<synchronous>, transform_indices = @transform_5, window_bounds = array<i64: 1, 32>}, {pipeline_mode = #tpu.pipeline_mode<synchronous>, transform_indices = @transform_6, window_bounds = array<i64: 1, 32>}, {pipeline_mode = #tpu.pipeline_mode<synchronous>, transform_indices = @transform_7, window_bounds = array<i64: 1, 32>}, {pipeline_mode = #tpu.pipeline_mode<synchronous>, transform_indices = @transform_8, window_bounds = array<i64: 32, 128>}, {pipeline_mode = #tpu.pipeline_mode<synchronous>, transform_indices = @transform_9, window_bounds = array<i64: 1, 128>}, {pipeline_mode = #tpu.pipeline_mode<synchronous>, transform_indices = @transform_10, window_bounds = array<i64: 128, 32>}, {pipeline_mode = #tpu.pipeline_mode<synchronous>, transform_indices = @transform_11, window_bounds = array<i64: 1, 32>}, {pipeline_mode = #tpu.pipeline_mode<synchronous>, transform_indices = @transform_12, window_bounds = array<i64: 1, 32>}, {pipeline_mode = #tpu.pipeline_mode<synchronous>, transform_indices = @transform_13, window_bounds = array<i64: 1, 32>}, {transform_indices = @transform_14, window_bounds = array<i64: 1, 8, 32>}]} {
    %c0_i32 = arith.constant 0 : i32
    %0 = arith.cmpi eq, %arg1, %c0_i32 : i32
    %1 = arith.extui %0 : i1 to i32
    %c0_i32_0 = arith.constant 0 : i32
    %2 = arith.cmpi ne, %1, %c0_i32_0 : i32
    scf.if %2 {
      %c0_64 = arith.constant 0 : index
      %c0_65 = arith.constant 0 : index
      %c0_66 = arith.constant 0 : index
      %120 = vector.load %arg3[%c0_64, %c0_65, %c0_66] : memref<1x32x8xbf16, #tpu.memory_space<vmem>>, vector<1x32x8xbf16>
      %121 = vector.shape_cast %120 : vector<1x32x8xbf16> to vector<32x8xbf16>
      %c0_67 = arith.constant 0 : index
      %c0_68 = arith.constant 0 : index
      %122 = vector.load %arg5[%c0_67, %c0_68] : memref<8x24xbf16, #tpu.memory_space<vmem>>, vector<8x24xbf16>
      %cst_69 = arith.constant dense<0.000000e+00> : vector<32x24xf32>
      %123 = tpu.matmul %121, %122, %cst_69 {dimension_numbers = #tpu.dot_dimension_numbers<[1], [0], [0], [1], [0, 0, 1, 1], [], []>} : vector<32x8xbf16>, vector<8x24xbf16>, vector<32x24xf32> -> vector<32x24xf32>
      %124 = vector.extract_strided_slice %123 {offsets = [0, 0], sizes = [8, 24], strides = [1, 1]} : vector<32x24xf32> to vector<8x24xf32>
      %125 = vector.extract_strided_slice %124 {offsets = [0, 0], sizes = [8, 8], strides = [1, 1]} : vector<8x24xf32> to vector<8x8xf32>
      %cst_70 = arith.constant 0.176776692 : f32
      %126 = vector.broadcast %cst_70 : f32 to vector<8x8xf32>
      %127 = arith.mulf %125, %126 : vector<8x8xf32>
      %128 = arith.truncf %127 : vector<8x8xf32> to vector<8x8xbf16>
      %c0_71 = arith.constant 0 : index
      %c0_72 = arith.constant 0 : index
      %c0_73 = arith.constant 0 : index
      %129 = vector.load %arg17[%c0_71, %c0_72, %c0_73] : memref<4x8x8xbf16, #tpu.memory_space<vmem>>, vector<1x8x8xbf16>
      %130 = vector.shape_cast %129 : vector<1x8x8xbf16> to vector<8x8xbf16>
      %131 = vector.shape_cast %128 : vector<8x8xbf16> to vector<1x8x8xbf16>
      tpu.vector_store %arg17[%c0_71, %c0_72, %c0_73], %131 {strides = array<i32>} : memref<4x8x8xbf16, #tpu.memory_space<vmem>>, vector<1x8x8xbf16>,
      %132 = vector.extract_strided_slice %124 {offsets = [0, 8], sizes = [8, 8], strides = [1, 1]} : vector<8x24xf32> to vector<8x8xf32>
      %133 = arith.truncf %132 : vector<8x8xf32> to vector<8x8xbf16>
      %c0_74 = arith.constant 0 : index
      %c0_75 = arith.constant 0 : index
      %c0_76 = arith.constant 0 : index
      %134 = vector.load %arg18[%c0_74, %c0_75, %c0_76] : memref<4x8x8xbf16, #tpu.memory_space<vmem>>, vector<1x8x8xbf16>
      %135 = vector.shape_cast %134 : vector<1x8x8xbf16> to vector<8x8xbf16>
      %136 = vector.shape_cast %133 : vector<8x8xbf16> to vector<1x8x8xbf16>
      tpu.vector_store %arg18[%c0_74, %c0_75, %c0_76], %136 {strides = array<i32>} : memref<4x8x8xbf16, #tpu.memory_space<vmem>>, vector<1x8x8xbf16>,
      %137 = vector.extract_strided_slice %124 {offsets = [0, 16], sizes = [8, 8], strides = [1, 1]} : vector<8x24xf32> to vector<8x8xf32>
      %138 = arith.truncf %137 : vector<8x8xf32> to vector<8x8xbf16>
      %c0_77 = arith.constant 0 : index
      %c0_78 = arith.constant 0 : index
      %c0_79 = arith.constant 0 : index
      %139 = vector.load %arg19[%c0_77, %c0_78, %c0_79] : memref<4x8x8xbf16, #tpu.memory_space<vmem>>, vector<1x8x8xbf16>
      %140 = vector.shape_cast %139 : vector<1x8x8xbf16> to vector<8x8xbf16>
      %141 = vector.shape_cast %138 : vector<8x8xbf16> to vector<1x8x8xbf16>
      tpu.vector_store %arg19[%c0_77, %c0_78, %c0_79], %141 {strides = array<i32>} : memref<4x8x8xbf16, #tpu.memory_space<vmem>>, vector<1x8x8xbf16>,
      %142 = vector.extract_strided_slice %123 {offsets = [8, 0], sizes = [8, 24], strides = [1, 1]} : vector<32x24xf32> to vector<8x24xf32>
      %143 = vector.extract_strided_slice %142 {offsets = [0, 0], sizes = [8, 8], strides = [1, 1]} : vector<8x24xf32> to vector<8x8xf32>
      %cst_80 = arith.constant 0.176776692 : f32
      %144 = vector.broadcast %cst_80 : f32 to vector<8x8xf32>
      %145 = arith.mulf %143, %144 : vector<8x8xf32>
      %146 = arith.truncf %145 : vector<8x8xf32> to vector<8x8xbf16>
      %c1 = arith.constant 1 : index
      %c0_81 = arith.constant 0 : index
      %c0_82 = arith.constant 0 : index
      %147 = vector.load %arg17[%c1, %c0_81, %c0_82] : memref<4x8x8xbf16, #tpu.memory_space<vmem>>, vector<1x8x8xbf16>
      %148 = vector.shape_cast %147 : vector<1x8x8xbf16> to vector<8x8xbf16>
      %149 = vector.shape_cast %146 : vector<8x8xbf16> to vector<1x8x8xbf16>
      tpu.vector_store %arg17[%c1, %c0_81, %c0_82], %149 {strides = array<i32>} : memref<4x8x8xbf16, #tpu.memory_space<vmem>>, vector<1x8x8xbf16>,
      %150 = vector.extract_strided_slice %142 {offsets = [0, 8], sizes = [8, 8], strides = [1, 1]} : vector<8x24xf32> to vector<8x8xf32>
      %151 = arith.truncf %150 : vector<8x8xf32> to vector<8x8xbf16>
      %c1_83 = arith.constant 1 : index
      %c0_84 = arith.constant 0 : index
      %c0_85 = arith.constant 0 : index
      %152 = vector.load %arg18[%c1_83, %c0_84, %c0_85] : memref<4x8x8xbf16, #tpu.memory_space<vmem>>, vector<1x8x8xbf16>
      %153 = vector.shape_cast %152 : vector<1x8x8xbf16> to vector<8x8xbf16>
      %154 = vector.shape_cast %151 : vector<8x8xbf16> to vector<1x8x8xbf16>
      tpu.vector_store %arg18[%c1_83, %c0_84, %c0_85], %154 {strides = array<i32>} : memref<4x8x8xbf16, #tpu.memory_space<vmem>>, vector<1x8x8xbf16>,
      %155 = vector.extract_strided_slice %142 {offsets = [0, 16], sizes = [8, 8], strides = [1, 1]} : vector<8x24xf32> to vector<8x8xf32>
      %156 = arith.truncf %155 : vector<8x8xf32> to vector<8x8xbf16>
      %c1_86 = arith.constant 1 : index
      %c0_87 = arith.constant 0 : index
      %c0_88 = arith.constant 0 : index
      %157 = vector.load %arg19[%c1_86, %c0_87, %c0_88] : memref<4x8x8xbf16, #tpu.memory_space<vmem>>, vector<1x8x8xbf16>
      %158 = vector.shape_cast %157 : vector<1x8x8xbf16> to vector<8x8xbf16>
      %159 = vector.shape_cast %156 : vector<8x8xbf16> to vector<1x8x8xbf16>
      tpu.vector_store %arg19[%c1_86, %c0_87, %c0_88], %159 {strides = array<i32>} : memref<4x8x8xbf16, #tpu.memory_space<vmem>>, vector<1x8x8xbf16>,
      %160 = vector.extract_strided_slice %123 {offsets = [16, 0], sizes = [8, 24], strides = [1, 1]} : vector<32x24xf32> to vector<8x24xf32>
      %161 = vector.extract_strided_slice %160 {offsets = [0, 0], sizes = [8, 8], strides = [1, 1]} : vector<8x24xf32> to vector<8x8xf32>
      %cst_89 = arith.constant 0.176776692 : f32
      %162 = vector.broadcast %cst_89 : f32 to vector<8x8xf32>
      %163 = arith.mulf %161, %162 : vector<8x8xf32>
      %164 = arith.truncf %163 : vector<8x8xf32> to vector<8x8xbf16>
      %c2 = arith.constant 2 : index
      %c0_90 = arith.constant 0 : index
      %c0_91 = arith.constant 0 : index
      %165 = vector.load %arg17[%c2, %c0_90, %c0_91] : memref<4x8x8xbf16, #tpu.memory_space<vmem>>, vector<1x8x8xbf16>
      %166 = vector.shape_cast %165 : vector<1x8x8xbf16> to vector<8x8xbf16>
      %167 = vector.shape_cast %164 : vector<8x8xbf16> to vector<1x8x8xbf16>
      tpu.vector_store %arg17[%c2, %c0_90, %c0_91], %167 {strides = array<i32>} : memref<4x8x8xbf16, #tpu.memory_space<vmem>>, vector<1x8x8xbf16>,
      %168 = vector.extract_strided_slice %160 {offsets = [0, 8], sizes = [8, 8], strides = [1, 1]} : vector<8x24xf32> to vector<8x8xf32>
      %169 = arith.truncf %168 : vector<8x8xf32> to vector<8x8xbf16>
      %c2_92 = arith.constant 2 : index
      %c0_93 = arith.constant 0 : index
      %c0_94 = arith.constant 0 : index
      %170 = vector.load %arg18[%c2_92, %c0_93, %c0_94] : memref<4x8x8xbf16, #tpu.memory_space<vmem>>, vector<1x8x8xbf16>
      %171 = vector.shape_cast %170 : vector<1x8x8xbf16> to vector<8x8xbf16>
      %172 = vector.shape_cast %169 : vector<8x8xbf16> to vector<1x8x8xbf16>
      tpu.vector_store %arg18[%c2_92, %c0_93, %c0_94], %172 {strides = array<i32>} : memref<4x8x8xbf16, #tpu.memory_space<vmem>>, vector<1x8x8xbf16>,
      %173 = vector.extract_strided_slice %160 {offsets = [0, 16], sizes = [8, 8], strides = [1, 1]} : vector<8x24xf32> to vector<8x8xf32>
      %174 = arith.truncf %173 : vector<8x8xf32> to vector<8x8xbf16>
      %c2_95 = arith.constant 2 : index
      %c0_96 = arith.constant 0 : index
      %c0_97 = arith.constant 0 : index
      %175 = vector.load %arg19[%c2_95, %c0_96, %c0_97] : memref<4x8x8xbf16, #tpu.memory_space<vmem>>, vector<1x8x8xbf16>
      %176 = vector.shape_cast %175 : vector<1x8x8xbf16> to vector<8x8xbf16>
      %177 = vector.shape_cast %174 : vector<8x8xbf16> to vector<1x8x8xbf16>
      tpu.vector_store %arg19[%c2_95, %c0_96, %c0_97], %177 {strides = array<i32>} : memref<4x8x8xbf16, #tpu.memory_space<vmem>>, vector<1x8x8xbf16>,
      %178 = vector.extract_strided_slice %123 {offsets = [24, 0], sizes = [8, 24], strides = [1, 1]} : vector<32x24xf32> to vector<8x24xf32>
      %179 = vector.extract_strided_slice %178 {offsets = [0, 0], sizes = [8, 8], strides = [1, 1]} : vector<8x24xf32> to vector<8x8xf32>
      %cst_98 = arith.constant 0.176776692 : f32
      %180 = vector.broadcast %cst_98 : f32 to vector<8x8xf32>
      %181 = arith.mulf %179, %180 : vector<8x8xf32>
      %182 = arith.truncf %181 : vector<8x8xf32> to vector<8x8xbf16>
      %c3 = arith.constant 3 : index
      %c0_99 = arith.constant 0 : index
      %c0_100 = arith.constant 0 : index
      %183 = vector.load %arg17[%c3, %c0_99, %c0_100] : memref<4x8x8xbf16, #tpu.memory_space<vmem>>, vector<1x8x8xbf16>
      %184 = vector.shape_cast %183 : vector<1x8x8xbf16> to vector<8x8xbf16>
      %185 = vector.shape_cast %182 : vector<8x8xbf16> to vector<1x8x8xbf16>
      tpu.vector_store %arg17[%c3, %c0_99, %c0_100], %185 {strides = array<i32>} : memref<4x8x8xbf16, #tpu.memory_space<vmem>>, vector<1x8x8xbf16>,
      %186 = vector.extract_strided_slice %178 {offsets = [0, 8], sizes = [8, 8], strides = [1, 1]} : vector<8x24xf32> to vector<8x8xf32>
      %187 = arith.truncf %186 : vector<8x8xf32> to vector<8x8xbf16>
      %c3_101 = arith.constant 3 : index
      %c0_102 = arith.constant 0 : index
      %c0_103 = arith.constant 0 : index
      %188 = vector.load %arg18[%c3_101, %c0_102, %c0_103] : memref<4x8x8xbf16, #tpu.memory_space<vmem>>, vector<1x8x8xbf16>
      %189 = vector.shape_cast %188 : vector<1x8x8xbf16> to vector<8x8xbf16>
      %190 = vector.shape_cast %187 : vector<8x8xbf16> to vector<1x8x8xbf16>
      tpu.vector_store %arg18[%c3_101, %c0_102, %c0_103], %190 {strides = array<i32>} : memref<4x8x8xbf16, #tpu.memory_space<vmem>>, vector<1x8x8xbf16>,
      %191 = vector.extract_strided_slice %178 {offsets = [0, 16], sizes = [8, 8], strides = [1, 1]} : vector<8x24xf32> to vector<8x8xf32>
      %192 = arith.truncf %191 : vector<8x8xf32> to vector<8x8xbf16>
      %c3_104 = arith.constant 3 : index
      %c0_105 = arith.constant 0 : index
      %c0_106 = arith.constant 0 : index
      %193 = vector.load %arg19[%c3_104, %c0_105, %c0_106] : memref<4x8x8xbf16, #tpu.memory_space<vmem>>, vector<1x8x8xbf16>
      %194 = vector.shape_cast %193 : vector<1x8x8xbf16> to vector<8x8xbf16>
      %195 = vector.shape_cast %192 : vector<8x8xbf16> to vector<1x8x8xbf16>
      tpu.vector_store %arg19[%c3_104, %c0_105, %c0_106], %195 {strides = array<i32>} : memref<4x8x8xbf16, #tpu.memory_space<vmem>>, vector<1x8x8xbf16>,
    } else {
    }
    %c8_i32 = arith.constant 8 : i32
    %3 = arith.muli %arg1, %c8_i32 : i32
    %4 = tpu.assume_multiple %3, 8 : i32
    %c0 = arith.constant 0 : index
    %5 = arith.index_cast %4 : i32 to index
    %c0_1 = arith.constant 0 : index
    %6 = vector.load %arg17[%c0, %5, %c0_1] : memref<4x8x8xbf16, #tpu.memory_space<vmem>>, vector<4x8x8xbf16>
    %c0_2 = arith.constant 0 : index
    %c0_3 = arith.constant 0 : index
    %c0_4 = arith.constant 0 : index
    %7 = vector.load %arg4[%c0_2, %c0_3, %c0_4] : memref<1x1x8xf32, #tpu.memory_space<vmem>>, vector<1x1x8xf32>
    %8 = vector.shape_cast %7 : vector<1x1x8xf32> to vector<1x8xf32>
    %cst = arith.constant 0.000000e+00 : f32
    %9 = vector.broadcast %cst : f32 to vector<1x8xf32>
    %10 = arith.cmpf oeq, %8, %9 : vector<1x8xf32>
    %cst_5 = arith.constant -1.76776698E+19 : f32
    %cst_6 = arith.constant 0.000000e+00 : f32
    %11 = vector.broadcast %cst_5 : f32 to vector<1x8xf32>
    %12 = vector.broadcast %cst_6 : f32 to vector<1x8xf32>
    %13 = arith.select %10, %11, %12 : vector<1x8xi1>, vector<1x8xf32>
    %c0_7 = arith.constant 0 : index
    %c0_8 = arith.constant 0 : index
    %c0_9 = arith.constant 0 : index
    %14 = vector.load %arg18[%c0_7, %c0_8, %c0_9] : memref<4x8x8xbf16, #tpu.memory_space<vmem>>, vector<4x8x8xbf16>
    "tpu.trace_start"() <{level = 10 : i32, message = "hqd,hkd->hqk"}> : () -> ()
    %cst_10 = arith.constant dense<0.000000e+00> : vector<4x8x8xf32>
    %15 = tpu.matmul %6, %14, %cst_10 {dimension_numbers = #tpu.dot_dimension_numbers<[2], [2], [1], [1], [0, 0, 0, 1, 1, 1], [0], [0]>} : vector<4x8x8xbf16>, vector<4x8x8xbf16>, vector<4x8x8xf32> -> vector<4x8x8xf32>
    "tpu.trace_stop"() : () -> ()
    %16 = vector.shape_cast %13 : vector<1x8xf32> to vector<1x1x8xf32>
    %17 = vector.broadcast %16 : vector<1x1x8xf32> to vector<4x8x8xf32>
    %18 = arith.addf %15, %17 : vector<4x8x8xf32>
    %cst_11 = arith.constant dense<0xFF800000> : vector<4x8xf32>
    %19 = vector.multi_reduction <maximumf>, %18, %cst_11 [2] : vector<4x8x8xf32> to vector<4x8xf32>
    %20 = vector.shape_cast %19 : vector<4x8xf32> to vector<4x8x1xf32>
    %21 = vector.broadcast %20 : vector<4x8x1xf32> to vector<4x8x8xf32>
    %22 = arith.subf %18, %21 : vector<4x8x8xf32>
    %23 = math.exp %22 : vector<4x8x8xf32>
    %cst_12 = arith.constant dense<0.000000e+00> : vector<4x8xf32>
    %24 = vector.multi_reduction <add>, %23, %cst_12 [2] : vector<4x8x8xf32> to vector<4x8xf32>
    %25 = vector.shape_cast %24 : vector<4x8xf32> to vector<4x8x1xf32>
    %26 = arith.truncf %23 : vector<4x8x8xf32> to vector<4x8x8xbf16>
    %c0_13 = arith.constant 0 : index
    %c0_14 = arith.constant 0 : index
    %c0_15 = arith.constant 0 : index
    %27 = vector.load %arg19[%c0_13, %c0_14, %c0_15] : memref<4x8x8xbf16, #tpu.memory_space<vmem>>, vector<4x8x8xbf16>
    "tpu.trace_start"() <{level = 10 : i32, message = "hqk,hkd->hqd"}> : () -> ()
    %cst_16 = arith.constant dense<0.000000e+00> : vector<4x8x8xf32>
    %28 = tpu.matmul %26, %27, %cst_16 {dimension_numbers = #tpu.dot_dimension_numbers<[2], [1], [1], [2], [0, 0, 0, 1, 1, 2], [0], [0]>} : vector<4x8x8xbf16>, vector<4x8x8xbf16>, vector<4x8x8xf32> -> vector<4x8x8xf32>
    "tpu.trace_stop"() : () -> ()
    %29 = tpu.reciprocal %25 {approx = true} : vector<4x8x1xf32> -> vector<4x8x1xf32>
    %30 = vector.broadcast %29 : vector<4x8x1xf32> to vector<4x8x8xf32>
    %31 = arith.mulf %28, %30 : vector<4x8x8xf32>
    %32 = arith.truncf %31 : vector<4x8x8xf32> to vector<4x8x8xbf16>
    %33 = vector.extract_strided_slice %32 {offsets = [0, 0, 0], sizes = [1, 8, 8], strides = [1, 1, 1]} : vector<4x8x8xbf16> to vector<1x8x8xbf16>
    %34 = vector.shape_cast %33 : vector<1x8x8xbf16> to vector<8x8xbf16>
    %c0_17 = arith.constant 0 : index
    %c0_18 = arith.constant 0 : index
    %35 = vector.load %arg20[%c0_17, %c0_18] : memref<8x32xbf16, #tpu.memory_space<vmem>>, vector<8x8xbf16>
    tpu.vector_store %arg20[%c0_17, %c0_18], %34 {strides = array<i32>} : memref<8x32xbf16, #tpu.memory_space<vmem>>, vector<8x8xbf16>,
    %36 = vector.extract_strided_slice %32 {offsets = [1, 0, 0], sizes = [1, 8, 8], strides = [1, 1, 1]} : vector<4x8x8xbf16> to vector<1x8x8xbf16>
    %37 = vector.shape_cast %36 : vector<1x8x8xbf16> to vector<8x8xbf16>
    %c0_19 = arith.constant 0 : index
    %c8 = arith.constant 8 : index
    %38 = vector.load %arg20[%c0_19, %c8] : memref<8x32xbf16, #tpu.memory_space<vmem>>, vector<8x8xbf16>
    tpu.vector_store %arg20[%c0_19, %c8], %37 {strides = array<i32>} : memref<8x32xbf16, #tpu.memory_space<vmem>>, vector<8x8xbf16>,
    %39 = vector.extract_strided_slice %32 {offsets = [2, 0, 0], sizes = [1, 8, 8], strides = [1, 1, 1]} : vector<4x8x8xbf16> to vector<1x8x8xbf16>
    %40 = vector.shape_cast %39 : vector<1x8x8xbf16> to vector<8x8xbf16>
    %c0_20 = arith.constant 0 : index
    %c16 = arith.constant 16 : index
    %41 = vector.load %arg20[%c0_20, %c16] : memref<8x32xbf16, #tpu.memory_space<vmem>>, vector<8x8xbf16>
    tpu.vector_store %arg20[%c0_20, %c16], %40 {strides = array<i32>} : memref<8x32xbf16, #tpu.memory_space<vmem>>, vector<8x8xbf16>,
    %42 = vector.extract_strided_slice %32 {offsets = [3, 0, 0], sizes = [1, 8, 8], strides = [1, 1, 1]} : vector<4x8x8xbf16> to vector<1x8x8xbf16>
    %43 = vector.shape_cast %42 : vector<1x8x8xbf16> to vector<8x8xbf16>
    %c0_21 = arith.constant 0 : index
    %c24 = arith.constant 24 : index
    %44 = vector.load %arg20[%c0_21, %c24] : memref<8x32xbf16, #tpu.memory_space<vmem>>, vector<8x8xbf16>
    tpu.vector_store %arg20[%c0_21, %c24], %43 {strides = array<i32>} : memref<8x32xbf16, #tpu.memory_space<vmem>>, vector<8x8xbf16>,
    %c0_22 = arith.constant 0 : index
    %c0_23 = arith.constant 0 : index
    %45 = vector.load %arg20[%c0_22, %c0_23] : memref<8x32xbf16, #tpu.memory_space<vmem>>, vector<8x32xbf16>
    %c0_24 = arith.constant 0 : index
    %c0_25 = arith.constant 0 : index
    %46 = vector.load %arg6[%c0_24, %c0_25] : memref<32x32xbf16, #tpu.memory_space<vmem>>, vector<32x32xbf16>
    %cst_26 = arith.constant dense<0.000000e+00> : vector<8x32xf32>
    %47 = tpu.matmul %45, %46, %cst_26 {dimension_numbers = #tpu.dot_dimension_numbers<[1], [0], [0], [1], [0, 0, 1, 1], [], []>} : vector<8x32xbf16>, vector<32x32xbf16>, vector<8x32xf32> -> vector<8x32xf32>
    %c0_27 = arith.constant 0 : index
    %c0_28 = arith.constant 0 : index
    %48 = vector.load %arg7[%c0_27, %c0_28] : memref<1x32xf32, #tpu.memory_space<vmem>>, vector<1x32xf32>
    %49 = vector.broadcast %48 : vector<1x32xf32> to vector<8x32xf32>
    %50 = arith.addf %47, %49 : vector<8x32xf32>
    %c0_29 = arith.constant 0 : index
    %c0_30 = arith.constant 0 : index
    %c0_31 = arith.constant 0 : index
    %51 = vector.load %arg2[%c0_29, %c0_30, %c0_31] : memref<1x8x32xf32, #tpu.memory_space<vmem>>, vector<1x8x32xf32>
    %52 = vector.shape_cast %51 : vector<1x8x32xf32> to vector<8x32xf32>
    %53 = arith.addf %50, %52 : vector<8x32xf32>
    %c0_32 = arith.constant 0 : index
    %c0_33 = arith.constant 0 : index
    %54 = vector.load %arg8[%c0_32, %c0_33] : memref<1x32xf32, #tpu.memory_space<vmem>>, vector<1x32xf32>
    %c0_34 = arith.constant 0 : index
    %c0_35 = arith.constant 0 : index
    %55 = vector.load %arg9[%c0_34, %c0_35] : memref<1x32xf32, #tpu.memory_space<vmem>>, vector<1x32xf32>
    %cst_36 = arith.constant dense<0.000000e+00> : vector<8xf32>
    %56 = vector.multi_reduction <add>, %53, %cst_36 [1] : vector<8x32xf32> to vector<8xf32>
    %57 = vector.shape_cast %56 : vector<8xf32> to vector<8x1xf32>
    %cst_37 = arith.constant 3.200000e+01 : f32
    %58 = vector.broadcast %cst_37 : f32 to vector<8x1xf32>
    %59 = arith.divf %57, %58 : vector<8x1xf32>
    %60 = vector.broadcast %59 : vector<8x1xf32> to vector<8x32xf32>
    %61 = arith.subf %53, %60 : vector<8x32xf32>
    %62 = arith.mulf %61, %61 : vector<8x32xf32>
    %cst_38 = arith.constant dense<0.000000e+00> : vector<8xf32>
    %63 = vector.multi_reduction <add>, %62, %cst_38 [1] : vector<8x32xf32> to vector<8xf32>
    %64 = vector.shape_cast %63 : vector<8xf32> to vector<8x1xf32>
    %cst_39 = arith.constant 3.200000e+01 : f32
    %65 = vector.broadcast %cst_39 : f32 to vector<8x1xf32>
    %66 = arith.divf %64, %65 : vector<8x1xf32>
    %67 = vector.broadcast %59 : vector<8x1xf32> to vector<8x32xf32>
    %68 = arith.subf %53, %67 : vector<8x32xf32>
    %cst_40 = arith.constant 9.99999974E-6 : f32
    %69 = vector.broadcast %cst_40 : f32 to vector<8x1xf32>
    %70 = arith.addf %66, %69 : vector<8x1xf32>
    %71 = math.rsqrt %70 : vector<8x1xf32>
    %72 = vector.broadcast %71 : vector<8x1xf32> to vector<8x32xf32>
    %73 = arith.mulf %68, %72 : vector<8x32xf32>
    %74 = vector.broadcast %54 : vector<1x32xf32> to vector<8x32xf32>
    %75 = arith.mulf %73, %74 : vector<8x32xf32>
    %76 = vector.broadcast %55 : vector<1x32xf32> to vector<8x32xf32>
    %77 = arith.addf %75, %76 : vector<8x32xf32>
    %78 = arith.truncf %77 : vector<8x32xf32> to vector<8x32xbf16>
    %c0_41 = arith.constant 0 : index
    %c0_42 = arith.constant 0 : index
    %79 = vector.load %arg10[%c0_41, %c0_42] : memref<32x128xbf16, #tpu.memory_space<vmem>>, vector<32x128xbf16>
    %cst_43 = arith.constant dense<0.000000e+00> : vector<8x128xf32>
    %80 = tpu.matmul %78, %79, %cst_43 {dimension_numbers = #tpu.dot_dimension_numbers<[1], [0], [0], [1], [0, 0, 1, 1], [], []>} : vector<8x32xbf16>, vector<32x128xbf16>, vector<8x128xf32> -> vector<8x128xf32>
    %c0_44 = arith.constant 0 : index
    %c0_45 = arith.constant 0 : index
    %81 = vector.load %arg11[%c0_44, %c0_45] : memref<1x128xf32, #tpu.memory_space<vmem>>, vector<1x128xf32>
    %82 = vector.broadcast %81 : vector<1x128xf32> to vector<8x128xf32>
    %83 = arith.addf %80, %82 : vector<8x128xf32>
    %cst_46 = arith.constant 0.000000e+00 : f32
    %84 = vector.broadcast %cst_46 : f32 to vector<8x128xf32>
    %85 = arith.maximumf %83, %84 : vector<8x128xf32>
    %86 = arith.truncf %85 : vector<8x128xf32> to vector<8x128xbf16>
    %c0_47 = arith.constant 0 : index
    %c0_48 = arith.constant 0 : index
    %87 = vector.load %arg12[%c0_47, %c0_48] : memref<128x32xbf16, #tpu.memory_space<vmem>>, vector<128x32xbf16>
    %cst_49 = arith.constant dense<0.000000e+00> : vector<8x32xf32>
    %88 = tpu.matmul %86, %87, %cst_49 {dimension_numbers = #tpu.dot_dimension_numbers<[1], [0], [0], [1], [0, 0, 1, 1], [], []>} : vector<8x128xbf16>, vector<128x32xbf16>, vector<8x32xf32> -> vector<8x32xf32>
    %c0_50 = arith.constant 0 : index
    %c0_51 = arith.constant 0 : index
    %89 = vector.load %arg13[%c0_50, %c0_51] : memref<1x32xf32, #tpu.memory_space<vmem>>, vector<1x32xf32>
    %90 = vector.broadcast %89 : vector<1x32xf32> to vector<8x32xf32>
    %91 = arith.addf %88, %90 : vector<8x32xf32>
    %92 = arith.addf %91, %77 : vector<8x32xf32>
    %c0_52 = arith.constant 0 : index
    %c0_53 = arith.constant 0 : index
    %93 = vector.load %arg14[%c0_52, %c0_53] : memref<1x32xf32, #tpu.memory_space<vmem>>, vector<1x32xf32>
    %c0_54 = arith.constant 0 : index
    %c0_55 = arith.constant 0 : index
    %94 = vector.load %arg15[%c0_54, %c0_55] : memref<1x32xf32, #tpu.memory_space<vmem>>, vector<1x32xf32>
    %cst_56 = arith.constant dense<0.000000e+00> : vector<8xf32>
    %95 = vector.multi_reduction <add>, %92, %cst_56 [1] : vector<8x32xf32> to vector<8xf32>
    %96 = vector.shape_cast %95 : vector<8xf32> to vector<8x1xf32>
    %cst_57 = arith.constant 3.200000e+01 : f32
    %97 = vector.broadcast %cst_57 : f32 to vector<8x1xf32>
    %98 = arith.divf %96, %97 : vector<8x1xf32>
    %99 = vector.broadcast %98 : vector<8x1xf32> to vector<8x32xf32>
    %100 = arith.subf %92, %99 : vector<8x32xf32>
    %101 = arith.mulf %100, %100 : vector<8x32xf32>
    %cst_58 = arith.constant dense<0.000000e+00> : vector<8xf32>
    %102 = vector.multi_reduction <add>, %101, %cst_58 [1] : vector<8x32xf32> to vector<8xf32>
    %103 = vector.shape_cast %102 : vector<8xf32> to vector<8x1xf32>
    %cst_59 = arith.constant 3.200000e+01 : f32
    %104 = vector.broadcast %cst_59 : f32 to vector<8x1xf32>
    %105 = arith.divf %103, %104 : vector<8x1xf32>
    %106 = vector.broadcast %98 : vector<8x1xf32> to vector<8x32xf32>
    %107 = arith.subf %92, %106 : vector<8x32xf32>
    %cst_60 = arith.constant 9.99999974E-6 : f32
    %108 = vector.broadcast %cst_60 : f32 to vector<8x1xf32>
    %109 = arith.addf %105, %108 : vector<8x1xf32>
    %110 = math.rsqrt %109 : vector<8x1xf32>
    %111 = vector.broadcast %110 : vector<8x1xf32> to vector<8x32xf32>
    %112 = arith.mulf %107, %111 : vector<8x32xf32>
    %113 = vector.broadcast %93 : vector<1x32xf32> to vector<8x32xf32>
    %114 = arith.mulf %112, %113 : vector<8x32xf32>
    %115 = vector.broadcast %94 : vector<1x32xf32> to vector<8x32xf32>
    %116 = arith.addf %114, %115 : vector<8x32xf32>
    %c0_61 = arith.constant 0 : index
    %c0_62 = arith.constant 0 : index
    %c0_63 = arith.constant 0 : index
    %117 = vector.load %arg16[%c0_61, %c0_62, %c0_63] : memref<1x8x32xf32, #tpu.memory_space<vmem>>, vector<1x8x32xf32>
    %118 = vector.shape_cast %117 : vector<1x8x32xf32> to vector<8x32xf32>
    %119 = vector.shape_cast %116 : vector<8x32xf32> to vector<1x8x32xf32>
    tpu.vector_store %arg16[%c0_61, %c0_62, %c0_63], %119 {strides = array<i32>} : memref<1x8x32xf32, #tpu.memory_space<vmem>>, vector<1x8x32xf32>,
    return
  }
  func.func @transform_0(%arg0: i32, %arg1: i32) -> (i32, i32, i32) {
    %c0_i32 = arith.constant 0 : i32
    %c0_i32_0 = arith.constant 0 : i32
    return %arg0, %arg1, %c0_i32 : i32, i32, i32
  }
  func.func @transform_1(%arg0: i32, %arg1: i32) -> (i32, i32, i32) {
    %c0_i32 = arith.constant 0 : i32
    %c0_i32_0 = arith.constant 0 : i32
    %c0_i32_1 = arith.constant 0 : i32
    return %arg0, %c0_i32, %c0_i32_0 : i32, i32, i32
  }
  func.func @transform_2(%arg0: i32, %arg1: i32) -> (i32, i32, i32) {
    %c0_i32 = arith.constant 0 : i32
    %c0_i32_0 = arith.constant 0 : i32
    %c0_i32_1 = arith.constant 0 : i32
    return %arg0, %c0_i32, %c0_i32_0 : i32, i32, i32
  }
  func.func @transform_3(%arg0: i32, %arg1: i32) -> (i32, i32) {
    %c0_i32 = arith.constant 0 : i32
    %c0_i32_0 = arith.constant 0 : i32
    %c0_i32_1 = arith.constant 0 : i32
    return %c0_i32, %c0_i32_0 : i32, i32
  }
  func.func @transform_4(%arg0: i32, %arg1: i32) -> (i32, i32) {
    %c0_i32 = arith.constant 0 : i32
    %c0_i32_0 = arith.constant 0 : i32
    %c0_i32_1 = arith.constant 0 : i32
    return %c0_i32, %c0_i32_0 : i32, i32
  }
  func.func @transform_5(%arg0: i32, %arg1: i32) -> (i32, i32) {
    %c0_i32 = arith.constant 0 : i32
    %c0_i32_0 = arith.constant 0 : i32
    %c0_i32_1 = arith.constant 0 : i32
    return %c0_i32, %c0_i32_0 : i32, i32
  }
  func.func @transform_6(%arg0: i32, %arg1: i32) -> (i32, i32) {
    %c0_i32 = arith.constant 0 : i32
    %c0_i32_0 = arith.constant 0 : i32
    %c0_i32_1 = arith.constant 0 : i32
    return %c0_i32, %c0_i32_0 : i32, i32
  }
  func.func @transform_7(%arg0: i32, %arg1: i32) -> (i32, i32) {
    %c0_i32 = arith.constant 0 : i32
    %c0_i32_0 = arith.constant 0 : i32
    %c0_i32_1 = arith.constant 0 : i32
    return %c0_i32, %c0_i32_0 : i32, i32
  }
  func.func @transform_8(%arg0: i32, %arg1: i32) -> (i32, i32) {
    %c0_i32 = arith.constant 0 : i32
    %c0_i32_0 = arith.constant 0 : i32
    %c0_i32_1 = arith.constant 0 : i32
    return %c0_i32, %c0_i32_0 : i32, i32
  }
  func.func @transform_9(%arg0: i32, %arg1: i32) -> (i32, i32) {
    %c0_i32 = arith.constant 0 : i32
    %c0_i32_0 = arith.constant 0 : i32
    %c0_i32_1 = arith.constant 0 : i32
    return %c0_i32, %c0_i32_0 : i32, i32
  }
  func.func @transform_10(%arg0: i32, %arg1: i32) -> (i32, i32) {
    %c0_i32 = arith.constant 0 : i32
    %c0_i32_0 = arith.constant 0 : i32
    %c0_i32_1 = arith.constant 0 : i32
    return %c0_i32, %c0_i32_0 : i32, i32
  }
  func.func @transform_11(%arg0: i32, %arg1: i32) -> (i32, i32) {
    %c0_i32 = arith.constant 0 : i32
    %c0_i32_0 = arith.constant 0 : i32
    %c0_i32_1 = arith.constant 0 : i32
    return %c0_i32, %c0_i32_0 : i32, i32
  }
  func.func @transform_12(%arg0: i32, %arg1: i32) -> (i32, i32) {
    %c0_i32 = arith.constant 0 : i32
    %c0_i32_0 = arith.constant 0 : i32
    %c0_i32_1 = arith.constant 0 : i32
    return %c0_i32, %c0_i32_0 : i32, i32
  }
  func.func @transform_13(%arg0: i32, %arg1: i32) -> (i32, i32) {
    %c0_i32 = arith.constant 0 : i32
    %c0_i32_0 = arith.constant 0 : i32
    %c0_i32_1 = arith.constant 0 : i32
    return %c0_i32, %c0_i32_0 : i32, i32
  }
  func.func @transform_14(%arg0: i32, %arg1: i32) -> (i32, i32, i32) {
    %c0_i32 = arith.constant 0 : i32
    %c0_i32_0 = arith.constant 0 : i32
    return %arg0, %arg1, %c0_i32 : i32, i32, i32
  }
}

</mosaic_0001>

<llo_original>
// kernel: encoder_forward.2
$region0: #{encoder_forward.2}
  #allocation0 [shape = 'u32[]', space=smem, size = 0x4, offset = 0x4, fixed_abs, tag = 'smem constant byte address 0x4 - core index']
  #allocation1 [shape = 'u32[144,128]{1,0:T(1,128)}', space=vmem, size = 0x12000, scoped, tag = 'internal scratch']
  #allocation2 [shape = 'bf16[4,8,8]{2,1,0:T(8,128)(2,1)}', space=vmem, size = 0x2000, scoped, tag = 'scratch operand']
  #allocation3 [shape = 'bf16[4,8,8]{2,1,0:T(8,128)(2,1)}', space=vmem, size = 0x2000, scoped, tag = 'scratch operand']
  #allocation4 [shape = 'bf16[4,8,8]{2,1,0:T(8,128)(2,1)}', space=vmem, size = 0x2000, scoped, tag = 'scratch operand']
  #allocation5 [shape = 'bf16[8,32]{1,0:T(8,128)(2,1)}', space=vmem, size = 0x800, scoped, tag = 'scratch operand']
  %s0 = inlined_call_operand.hbm [shape: f32[2,8,32], index: 0, kind: input, shape index: {}]
  %s1 = inlined_call_operand.hbm [shape: bf16[2,32,8], index: 1, kind: input, shape index: {}]
  %s2 = inlined_call_operand.hbm [shape: f32[2,1,8], index: 2, kind: input, shape index: {}]
  %s3 = inlined_call_operand.hbm [shape: bf16[8,24], index: 3, kind: input, shape index: {}]
  %s4 = inlined_call_operand.hbm [shape: bf16[32,32], index: 4, kind: input, shape index: {}]
  %s5 = inlined_call_operand.hbm [shape: f32[1,32], index: 5, kind: input, shape index: {}]
  %s6 = inlined_call_operand.hbm [shape: f32[1,32], index: 6, kind: input, shape index: {}]
  %s7 = inlined_call_operand.hbm [shape: f32[1,32], index: 7, kind: input, shape index: {}]
  %s8 = inlined_call_operand.hbm [shape: bf16[32,128], index: 8, kind: input, shape index: {}]
  %s9 = inlined_call_operand.hbm [shape: f32[1,128], index: 9, kind: input, shape index: {}]
  %s10 = inlined_call_operand.hbm [shape: bf16[128,32], index: 10, kind: input, shape index: {}]
  %s11 = inlined_call_operand.hbm [shape: f32[1,32], index: 11, kind: input, shape index: {}]
  %s12 = inlined_call_operand.hbm [shape: f32[1,32], index: 12, kind: input, shape index: {}]
  %s13 = inlined_call_operand.hbm [shape: f32[1,32], index: 13, kind: input, shape index: {}]
  %s14 = inlined_call_operand.hbm [shape: f32[2,8,32], index: 14, kind: output, shape index: {}]
  %s15 = sld [smem:[#allocation0]]
  $region149: #{encoder_forward.2} parent=0
    _
  %s17 = ssub.s32 1, %s15
  %s18 = scalar_select 0, %s17, %s15
  $region1: #{encoder_forward.2} parent=0
    #allocation6 [shape = 'u8[8192]{0}', space=vmem, size = 0x2000, scoped, tag = 'input window, operand 0']
    #allocation7 [shape = 's32[2]{0}', space=sflag, size = 0x8, scoped, tag = 'scoped memory for encoder_forward.2']
    #allocation8 [shape = 's32[2]{0}', space=sflag, size = 0x8, scoped, tag = 'scoped memory for encoder_forward.2']
    #allocation9 [shape = 'u8[16384]{0}', space=vmem, size = 0x4000, scoped, tag = 'input window, operand 1']
    #allocation10 [shape = 's32[2]{0}', space=sflag, size = 0x8, scoped, tag = 'scoped memory for encoder_forward.2']
    #allocation11 [shape = 'u8[1024]{0}', space=vmem, size = 0x400, scoped, tag = 'input window, operand 2']
    #allocation12 [shape = 'u8[2048]{0}', space=vmem, size = 0x800, scoped, tag = 'input window, operand 3, single buffered']
    #allocation13 [shape = 's32[1]{0}', space=sflag, size = 0x4, scoped, tag = 'scoped memory for encoder_forward.2']
    #allocation14 [shape = 'u8[8192]{0}', space=vmem, size = 0x2000, scoped, tag = 'input window, operand 4, single buffered']
    #allocation15 [shape = 'u8[512]{0}', space=vmem, size = 0x400, scoped, tag = 'input window, operand 5, single buffered']
    #allocation16 [shape = 's32[1]{0}', space=sflag, size = 0x4, scoped, tag = 'scoped memory for encoder_forward.2']
    #allocation17 [shape = 'u8[512]{0}', space=vmem, size = 0x400, scoped, tag = 'input window, operand 6, single buffered']
    #allocation18 [shape = 'u8[512]{0}', space=vmem, size = 0x400, scoped, tag = 'input window, operand 7, single buffered']
    #allocation19 [shape = 's32[1]{0}', space=sflag, size = 0x4, scoped, tag = 'scoped memory for encoder_forward.2']
    #allocation20 [shape = 'u8[8192]{0}', space=vmem, size = 0x2000, scoped, tag = 'input window, operand 8, single buffered']
    #allocation21 [shape = 'u8[512]{0}', space=vmem, size = 0x400, scoped, tag = 'input window, operand 9, single buffered']
    #allocation22 [shape = 's32[1]{0}', space=sflag, size = 0x4, scoped, tag = 'scoped memory for encoder_forward.2']
    #allocation23 [shape = 'u8[32768]{0}', space=vmem, size = 0x8000, scoped, tag = 'input window, operand 10, single buffered']
    #allocation24 [shape = 'u8[512]{0}', space=vmem, size = 0x400, scoped, tag = 'input window, operand 11, single buffered']
    #allocation25 [shape = 's32[1]{0}', space=sflag, size = 0x4, scoped, tag = 'scoped memory for encoder_forward.2']
    #allocation26 [shape = 'u8[512]{0}', space=vmem, size = 0x400, scoped, tag = 'input window, operand 12, single buffered']
    #allocation27 [shape = 'u8[512]{0}', space=vmem, size = 0x400, scoped, tag = 'input window, operand 13, single buffered']
    #allocation28 [shape = 's32[1]{0}', space=sflag, size = 0x4, scoped, tag = 'scoped memory for encoder_forward.2']
    #allocation29 [shape = 'u8[8192]{0}', space=vmem, size = 0x2000, scoped, tag = 'output window, operand 0']
    %19 = vsyncpa [#allocation7], 0
    %s20 = scalar_lea.sflag [#allocation7], 1
    %21 = vsyncpa %s20, 0
    %22 = vsyncpa [#allocation10], 0
    %s23 = scalar_lea.sflag [#allocation10], 1
    %24 = vsyncpa %s23, 0
    %25 = vsyncpa [#allocation13], 0
    %26 = vsyncpa [#allocation16], 0
    %27 = vsyncpa [#allocation19], 0
    %28 = vsyncpa [#allocation22], 0
    %29 = vsyncpa [#allocation25], 0
    %30 = vsyncpa [#allocation28], 0
    %31 = vsyncpa [#allocation8], 0
    %s32 = scalar_lea.sflag [#allocation8], 1
    %33 = vsyncpa %s32, 0
    loop: start=0, step=1, limit=4
    $region2: #{encoder_forward.2} parent=1 // loop_pre_header
      _
    $region3: #{encoder_forward.2} parent=1 // loop_header
      %s35 = sphi 0, %s39
      %p36 = scmp.ge.s32.totalorder %s35, 4
      %s42 = sphi 0, %s54
      %s43 = sphi 0, %s50
      %s44 = sphi 0, %s42
      %s45 = sphi 0, %s43
      %s46 = sphi 0, %s44
      %s47 = sphi 0, %s45
      %s59 = sphi 0, %s61
      %s62 = sphi 0, %s59
      %s63 = sphi 0, %s62
      %s79 = sphi 0, %s63
      %s85 = sphi 0, %s87
      %s88 = sphi 0, %s85
      %s89 = sphi 0, %s88
      %s105 = sphi 0, %s89
      %s111 = sphi 0, %s113
      %s114 = sphi 0, %s111
      %s115 = sphi 0, %s114
      %s131 = sphi 0, %s115
      %s135 = sphi 0, %s135
      %s137 = sphi 0, %s135
      %s138 = sphi 0, %s137
      %s152 = sphi 0, %s138
      %s156 = sphi 0, %s156
      %s158 = sphi 0, %s156
      %s159 = sphi 0, %s158
      %s173 = sphi 0, %s159
      %s177 = sphi 0, %s177
      %s179 = sphi 0, %s177
      %s180 = sphi 0, %s179
      %s194 = sphi 0, %s180
      %s198 = sphi 0, %s198
      %s200 = sphi 0, %s198
      %s201 = sphi 0, %s200
      %s215 = sphi 0, %s201
      %s219 = sphi 0, %s219
      %s221 = sphi 0, %s219
      %s222 = sphi 0, %s221
      %s236 = sphi 0, %s222
      %s240 = sphi 0, %s240
      %s242 = sphi 0, %s240
      %s243 = sphi 0, %s242
      %s257 = sphi 0, %s243
      %s261 = sphi 0, %s261
      %s263 = sphi 0, %s261
      %s264 = sphi 0, %s263
      %s278 = sphi 0, %s264
      %s282 = sphi 0, %s282
      %s284 = sphi 0, %s282
      %s285 = sphi 0, %s284
      %s299 = sphi 0, %s285
      %s303 = sphi 0, %s303
      %s305 = sphi 0, %s303
      %s306 = sphi 0, %s305
      %s320 = sphi 0, %s306
      %s324 = sphi 0, %s324
      %s326 = sphi 0, %s324
      %s327 = sphi 0, %s326
      %s341 = sphi 0, %s327
      %s345 = sphi 0, %s345
      %s347 = sphi 0, %s345
      %s348 = sphi 0, %s347
      %s362 = sphi 0, %s348
      %s370 = sphi 0, %s372
      %s373 = sphi 0, %s370
      %s374 = sphi 0, %s373
      %s390 = sphi 0, %s374
    $region4: #{encoder_forward.2} parent=1 // loop_header_branch
      %38 = sbr.rel (%p36) target = $region8
    $region5: #{encoder_forward.2} parent=1 // loop_body
      %s40 = ssub.s32 %s35, 1
      %s41 = ssub.s32 %s35, 2
      %s48 = sadd.s32 1, %s43
      %p49 = scmp.ge.s32.totalorder %s48, 1
      %s50 = scalar_select %p49, 0, %s48
      %s51 = sadd.s32 1, %s42
      %s52 = scalar_select %p49, %s51, %s42
      %p53 = scmp.ge.s32.totalorder %s52, 2
      %s54 = scalar_select %p53, 0, %s52
      %s55 = ssub.s32 %s42, %s54
      %s56 = ssub.s32 %s43, %s50
      %s57 = sor.u32 %s55, %s56
      %p58 = scmp.eq.s32.totalorder %s57, 0
      %s60 = sadd.s32 %s59, 1
      %s61 = scalar_select %p58, %s59, %s60
      %p64 = pneg %p58
      %p65 = scmp.eq.s32.totalorder %s35, 1
      %p66 = por %p64, %p65
      %p67 = scmp.ne.s32.totalorder %s59, %s62
      %p68 = scmp.eq.s32.totalorder %s35, 0
      %p69 = por %p67, %p68
      %p70 = scmp.ne.s32.totalorder %s59, %s62
      %p71 = scmp.eq.s32.totalorder %s40, 1
      %p72 = por %p70, %p71
      %p73 = scmp.ne.s32.totalorder %s62, %s63
      %p74 = scmp.eq.s32.totalorder %s40, 0
      %p75 = por %p73, %p74
      %p76 = scmp.ne.s32.totalorder %s62, %s63
      %p77 = scmp.eq.s32.totalorder %s41, 1
      %p78 = por %p76, %p77
      %p80 = scmp.ne.s32.totalorder %s63, %s79
      %p81 = scmp.eq.s32.totalorder %s41, 0
      %p82 = por %p80, %p81
      %s83 = ssub.s32 %s42, %s54
      %p84 = scmp.eq.s32.totalorder %s83, 0
      %s86 = sadd.s32 %s85, 1
      %s87 = scalar_select %p84, %s85, %s86
      %p90 = pneg %p84
      %p91 = scmp.eq.s32.totalorder %s35, 1
      %p92 = por %p90, %p91
      %p93 = scmp.ne.s32.totalorder %s85, %s88
      %p94 = scmp.eq.s32.totalorder %s35, 0
      %p95 = por %p93, %p94
      %p96 = scmp.ne.s32.totalorder %s85, %s88
      %p97 = scmp.eq.s32.totalorder %s40, 1
      %p98 = por %p96, %p97
      %p99 = scmp.ne.s32.totalorder %s88, %s89
      %p100 = scmp.eq.s32.totalorder %s40, 0
      %p101 = por %p99, %p100
      %p102 = scmp.ne.s32.totalorder %s88, %s89
      %p103 = scmp.eq.s32.totalorder %s41, 1
      %p104 = por %p102, %p103
      %p106 = scmp.ne.s32.totalorder %s89, %s105
      %p107 = scmp.eq.s32.totalorder %s41, 0
      %p108 = por %p106, %p107
      %s109 = ssub.s32 %s42, %s54
      %p110 = scmp.eq.s32.totalorder %s109, 0
      %s112 = sadd.s32 %s111, 1
      %s113 = scalar_select %p110, %s111, %s112
      %p116 = pneg %p110
      %p117 = scmp.eq.s32.totalorder %s35, 1
      %p118 = por %p116, %p117
      %p119 = scmp.ne.s32.totalorder %s111, %s114
      %p120 = scmp.eq.s32.totalorder %s35, 0
      %p121 = por %p119, %p120
      %p122 = scmp.ne.s32.totalorder %s111, %s114
      %p123 = scmp.eq.s32.totalorder %s40, 1
      %p124 = por %p122, %p123
      %p125 = scmp.ne.s32.totalorder %s114, %s115
      %p126 = scmp.eq.s32.totalorder %s40, 0
      %p127 = por %p125, %p126
      %p128 = scmp.ne.s32.totalorder %s114, %s115
      %p129 = scmp.eq.s32.totalorder %s41, 1
      %p130 = por %p128, %p129
      %p132 = scmp.ne.s32.totalorder %s115, %s131
      %p133 = scmp.eq.s32.totalorder %s41, 0
      %p134 = por %p132, %p133
      %s136 = sadd.s32 %s135, 1
      %p139 = scmp.eq.s32.totalorder %s35, 1
      %p140 = scmp.ne.s32.totalorder %s135, %s137
      %p141 = scmp.eq.s32.totalorder %s35, 0
      %p142 = por %p140, %p141
      %p143 = scmp.ne.s32.totalorder %s135, %s137
      %p144 = scmp.eq.s32.totalorder %s40, 1
      %p145 = por %p143, %p144
      %p146 = scmp.ne.s32.totalorder %s137, %s138
      %p147 = scmp.eq.s32.totalorder %s40, 0
      %p148 = por %p146, %p147
      %p149 = scmp.ne.s32.totalorder %s137, %s138
      %p150 = scmp.eq.s32.totalorder %s41, 1
      %p151 = por %p149, %p150
      %p153 = scmp.ne.s32.totalorder %s138, %s152
      %p154 = scmp.eq.s32.totalorder %s41, 0
      %p155 = por %p153, %p154
      %s157 = sadd.s32 %s156, 1
      %p160 = scmp.eq.s32.totalorder %s35, 1
      %p161 = scmp.ne.s32.totalorder %s156, %s158
      %p162 = scmp.eq.s32.totalorder %s35, 0
      %p163 = por %p161, %p162
      %p164 = scmp.ne.s32.totalorder %s156, %s158
      %p165 = scmp.eq.s32.totalorder %s40, 1
      %p166 = por %p164, %p165
      %p167 = scmp.ne.s32.totalorder %s158, %s159
      %p168 = scmp.eq.s32.totalorder %s40, 0
      %p169 = por %p167, %p168
      %p170 = scmp.ne.s32.totalorder %s158, %s159
      %p171 = scmp.eq.s32.totalorder %s41, 1
      %p172 = por %p170, %p171
      %p174 = scmp.ne.s32.totalorder %s159, %s173
      %p175 = scmp.eq.s32.totalorder %s41, 0
      %p176 = por %p174, %p175
      %s178 = sadd.s32 %s177, 1
      %p181 = scmp.eq.s32.totalorder %s35, 1
      %p182 = scmp.ne.s32.totalorder %s177, %s179
      %p183 = scmp.eq.s32.totalorder %s35, 0
      %p184 = por %p182, %p183
      %p185 = scmp.ne.s32.totalorder %s177, %s179
      %p186 = scmp.eq.s32.totalorder %s40, 1
      %p187 = por %p185, %p186
      %p188 = scmp.ne.s32.totalorder %s179, %s180
      %p189 = scmp.eq.s32.totalorder %s40, 0
      %p190 = por %p188, %p189
      %p191 = scmp.ne.s32.totalorder %s179, %s180
      %p192 = scmp.eq.s32.totalorder %s41, 1
      %p193 = por %p191, %p192
      %p195 = scmp.ne.s32.totalorder %s180, %s194
      %p196 = scmp.eq.s32.totalorder %s41, 0
      %p197 = por %p195, %p196
      %s199 = sadd.s32 %s198, 1
      %p202 = scmp.eq.s32.totalorder %s35, 1
      %p203 = scmp.ne.s32.totalorder %s198, %s200
      %p204 = scmp.eq.s32.totalorder %s35, 0
      %p205 = por %p203, %p204
      %p206 = scmp.ne.s32.totalorder %s198, %s200
      %p207 = scmp.eq.s32.totalorder %s40, 1
      %p208 = por %p206, %p207
      %p209 = scmp.ne.s32.totalorder %s200, %s201
      %p210 = scmp.eq.s32.totalorder %s40, 0
      %p211 = por %p209, %p210
      %p212 = scmp.ne.s32.totalorder %s200, %s201
      %p213 = scmp.eq.s32.totalorder %s41, 1
      %p214 = por %p212, %p213
      %p216 = scmp.ne.s32.totalorder %s201, %s215
      %p217 = scmp.eq.s32.totalorder %s41, 0
      %p218 = por %p216, %p217
      %s220 = sadd.s32 %s219, 1
      %p223 = scmp.eq.s32.totalorder %s35, 1
      %p224 = scmp.ne.s32.totalorder %s219, %s221
      %p225 = scmp.eq.s32.totalorder %s35, 0
      %p226 = por %p224, %p225
      %p227 = scmp.ne.s32.totalorder %s219, %s221
      %p228 = scmp.eq.s32.totalorder %s40, 1
      %p229 = por %p227, %p228
      %p230 = scmp.ne.s32.totalorder %s221, %s222
      %p231 = scmp.eq.s32.totalorder %s40, 0
      %p232 = por %p230, %p231
      %p233 = scmp.ne.s32.totalorder %s221, %s222
      %p234 = scmp.eq.s32.totalorder %s41, 1
      %p235 = por %p233, %p234
      %p237 = scmp.ne.s32.totalorder %s222, %s236
      %p238 = scmp.eq.s32.totalorder %s41, 0
      %p239 = por %p237, %p238
      %s241 = sadd.s32 %s240, 1
      %p244 = scmp.eq.s32.totalorder %s35, 1
      %p245 = scmp.ne.s32.totalorder %s240, %s242
      %p246 = scmp.eq.s32.totalorder %s35, 0
      %p247 = por %p245, %p246
      %p248 = scmp.ne.s32.totalorder %s240, %s242
      %p249 = scmp.eq.s32.totalorder %s40, 1
      %p250 = por %p248, %p249
      %p251 = scmp.ne.s32.totalorder %s242, %s243
      %p252 = scmp.eq.s32.totalorder %s40, 0
      %p253 = por %p251, %p252
      %p254 = scmp.ne.s32.totalorder %s242, %s243
      %p255 = scmp.eq.s32.totalorder %s41, 1
      %p256 = por %p254, %p255
      %p258 = scmp.ne.s32.totalorder %s243, %s257
      %p259 = scmp.eq.s32.totalorder %s41, 0
      %p260 = por %p258, %p259
      %s262 = sadd.s32 %s261, 1
      %p265 = scmp.eq.s32.totalorder %s35, 1
      %p266 = scmp.ne.s32.totalorder %s261, %s263
      %p267 = scmp.eq.s32.totalorder %s35, 0
      %p268 = por %p266, %p267
      %p269 = scmp.ne.s32.totalorder %s261, %s263
      %p270 = scmp.eq.s32.totalorder %s40, 1
      %p271 = por %p269, %p270
      %p272 = scmp.ne.s32.totalorder %s263, %s264
      %p273 = scmp.eq.s32.totalorder %s40, 0
      %p274 = por %p272, %p273
      %p275 = scmp.ne.s32.totalorder %s263, %s264
      %p276 = scmp.eq.s32.totalorder %s41, 1
      %p277 = por %p275, %p276
      %p279 = scmp.ne.s32.totalorder %s264, %s278
      %p280 = scmp.eq.s32.totalorder %s41, 0
      %p281 = por %p279, %p280
      %s283 = sadd.s32 %s282, 1
      %p286 = scmp.eq.s32.totalorder %s35, 1
      %p287 = scmp.ne.s32.totalorder %s282, %s284
      %p288 = scmp.eq.s32.totalorder %s35, 0
      %p289 = por %p287, %p288
      %p290 = scmp.ne.s32.totalorder %s282, %s284
      %p291 = scmp.eq.s32.totalorder %s40, 1
      %p292 = por %p290, %p291
      %p293 = scmp.ne.s32.totalorder %s284, %s285
      %p294 = scmp.eq.s32.totalorder %s40, 0
      %p295 = por %p293, %p294
      %p296 = scmp.ne.s32.totalorder %s284, %s285
      %p297 = scmp.eq.s32.totalorder %s41, 1
      %p298 = por %p296, %p297
      %p300 = scmp.ne.s32.totalorder %s285, %s299
      %p301 = scmp.eq.s32.totalorder %s41, 0
      %p302 = por %p300, %p301
      %s304 = sadd.s32 %s303, 1
      %p307 = scmp.eq.s32.totalorder %s35, 1
      %p308 = scmp.ne.s32.totalorder %s303, %s305
      %p309 = scmp.eq.s32.totalorder %s35, 0
      %p310 = por %p308, %p309
      %p311 = scmp.ne.s32.totalorder %s303, %s305
      %p312 = scmp.eq.s32.totalorder %s40, 1
      %p313 = por %p311, %p312
      %p314 = scmp.ne.s32.totalorder %s305, %s306
      %p315 = scmp.eq.s32.totalorder %s40, 0
      %p316 = por %p314, %p315
      %p317 = scmp.ne.s32.totalorder %s305, %s306
      %p318 = scmp.eq.s32.totalorder %s41, 1
      %p319 = por %p317, %p318
      %p321 = scmp.ne.s32.totalorder %s306, %s320
      %p322 = scmp.eq.s32.totalorder %s41, 0
      %p323 = por %p321, %p322
      %s325 = sadd.s32 %s324, 1
      %p328 = scmp.eq.s32.totalorder %s35, 1
      %p329 = scmp.ne.s32.totalorder %s324, %s326
      %p330 = scmp.eq.s32.totalorder %s35, 0
      %p331 = por %p329, %p330
      %p332 = scmp.ne.s32.totalorder %s324, %s326
      %p333 = scmp.eq.s32.totalorder %s40, 1
      %p334 = por %p332, %p333
      %p335 = scmp.ne.s32.totalorder %s326, %s327
      %p336 = scmp.eq.s32.totalorder %s40, 0
      %p337 = por %p335, %p336
      %p338 = scmp.ne.s32.totalorder %s326, %s327
      %p339 = scmp.eq.s32.totalorder %s41, 1
      %p340 = por %p338, %p339
      %p342 = scmp.ne.s32.totalorder %s327, %s341
      %p343 = scmp.eq.s32.totalorder %s41, 0
      %p344 = por %p342, %p343
      %s346 = sadd.s32 %s345, 1
      %p349 = scmp.eq.s32.totalorder %s35, 1
      %p350 = scmp.ne.s32.totalorder %s345, %s347
      %p351 = scmp.eq.s32.totalorder %s35, 0
      %p352 = por %p350, %p351
      %p353 = scmp.ne.s32.totalorder %s345, %s347
      %p354 = scmp.eq.s32.totalorder %s40, 1
      %p355 = por %p353, %p354
      %p356 = scmp.ne.s32.totalorder %s347, %s348
      %p357 = scmp.eq.s32.totalorder %s40, 0
      %p358 = por %p356, %p357
      %p359 = scmp.ne.s32.totalorder %s347, %s348
      %p360 = scmp.eq.s32.totalorder %s41, 1
      %p361 = por %p359, %p360
      %p363 = scmp.ne.s32.totalorder %s348, %s362
      %p364 = scmp.eq.s32.totalorder %s41, 0
      %p365 = por %p363, %p364
      %s366 = ssub.s32 %s42, %s54
      %s367 = ssub.s32 %s43, %s50
      %s368 = sor.u32 %s366, %s367
      %p369 = scmp.eq.s32.totalorder %s368, 0
      %s371 = sadd.s32 %s370, 1
      %s372 = scalar_select %p369, %s370, %s371
      %p375 = pneg %p369
      %p376 = scmp.eq.s32.totalorder %s35, 1
      %p377 = por %p375, %p376
      %p378 = scmp.ne.s32.totalorder %s370, %s373
      %p379 = scmp.eq.s32.totalorder %s35, 0
      %p380 = por %p378, %p379
      %p381 = scmp.ne.s32.totalorder %s370, %s373
      %p382 = scmp.eq.s32.totalorder %s40, 1
      %p383 = por %p381, %p382
      %p384 = scmp.ne.s32.totalorder %s373, %s374
      %p385 = scmp.eq.s32.totalorder %s40, 0
      %p386 = por %p384, %p385
      %p387 = scmp.ne.s32.totalorder %s373, %s374
      %p388 = scmp.eq.s32.totalorder %s41, 1
      %p389 = por %p387, %p388
      %p391 = scmp.ne.s32.totalorder %s374, %s390
      %p392 = scmp.eq.s32.totalorder %s41, 0
      %p393 = por %p391, %p392
      %p394 = scmp.le.s32.totalorder 1, %s35
      %p395 = scmp.lt.s32.totalorder %s35, 3
      %p396 = pnand %p394, %p395
      %p397 = pneg %p396
      // Predicated region
      $region9: #{encoder_forward.2} parent=5 // pred_check
        _
      $region10: #{encoder_forward.2} parent=5 // pred_check_branch
        %399 = sbr.rel (%p396) target = $region12
      $region11: #{encoder_forward.2} parent=5 // pred_region
        %s400 = ssub.s32 %s35, 1
        // Predicated region
        $region13: #{encoder_forward.2} parent=11 // pred_check
          %p401 = pneg %p148
        $region14: #{encoder_forward.2} parent=11 // pred_check_branch
          %403 = sbr.rel (%p401) target = $region16
        $region15: #{encoder_forward.2} parent=11 // pred_region
          %s405 = ssub.s32 64, 64
          %406 = vsyncadd [#allocation13], %s405
          %s408 = sshll.u32 [#allocation12], 4
          %s409 = int_to_ptr.vmem [resolvable:$true] %s408
          %411 = dma.hbm_to_vmem [thread:$0]  %s3, 64, %s409, [#allocation13]
        $region16: #{encoder_forward.2} parent=11 // pred_fallthru
          _
        // Predicated region
        $region17: #{encoder_forward.2} parent=11 // pred_check
          %p412 = pneg %p169
        $region18: #{encoder_forward.2} parent=11 // pred_check_branch
          %414 = sbr.rel (%p412) target = $region20
        $region19: #{encoder_forward.2} parent=11 // pred_region
          %s416 = ssub.s32 256, 256
          %417 = vsyncadd [#allocation13], %s416
          %s418 = sshll.u32 [#allocation14], 4
          %s419 = int_to_ptr.vmem [resolvable:$true] %s418
          %424 = dma.hbm_to_vmem [thread:$0]  %s4, 256, %s419, [#allocation13], 64, 64, 4
        $region20: #{encoder_forward.2} parent=11 // pred_fallthru
          _
        // Predicated region
        $region21: #{encoder_forward.2} parent=11 // pred_check
          %p425 = pneg %p190
        $region22: #{encoder_forward.2} parent=11 // pred_check_branch
          %427 = sbr.rel (%p425) target = $region24
        $region23: #{encoder_forward.2} parent=11 // pred_region
          %s429 = ssub.s32 16, 16
          %430 = vsyncadd [#allocation16], %s429
          %s432 = sshll.u32 [#allocation15], 4
          %s433 = int_to_ptr.vmem [resolvable:$true] %s432
          %435 = dma.hbm_to_vmem [thread:$0]  %s5, 16, %s433, [#allocation16]
        $region24: #{encoder_forward.2} parent=11 // pred_fallthru
          _
        // Predicated region
        $region25: #{encoder_forward.2} parent=11 // pred_check
          %p436 = pneg %p211
        $region26: #{encoder_forward.2} parent=11 // pred_check_branch
          %438 = sbr.rel (%p436) target = $region28
        $region27: #{encoder_forward.2} parent=11 // pred_region
          %s440 = ssub.s32 16, 16
          %441 = vsyncadd [#allocation16], %s440
          %s443 = sshll.u32 [#allocation17], 4
          %s444 = int_to_ptr.vmem [resolvable:$true] %s443
          %446 = dma.hbm_to_vmem [thread:$0]  %s6, 16, %s444, [#allocation16]
        $region28: #{encoder_forward.2} parent=11 // pred_fallthru
          _
        // Predicated region
        $region29: #{encoder_forward.2} parent=11 // pred_check
          %p447 = pneg %p232
        $region30: #{encoder_forward.2} parent=11 // pred_check_branch
          %449 = sbr.rel (%p447) target = $region32
        $region31: #{encoder_forward.2} parent=11 // pred_region
          %s451 = ssub.s32 16, 16
          %452 = vsyncadd [#allocation19], %s451
          %s454 = sshll.u32 [#allocation18], 4
          %s455 = int_to_ptr.vmem [resolvable:$true] %s454
          %457 = dma.hbm_to_vmem [thread:$0]  %s7, 16, %s455, [#allocation19]
        $region32: #{encoder_forward.2} parent=11 // pred_fallthru
          _
        // Predicated region
        $region33: #{encoder_forward.2} parent=11 // pred_check
          %p458 = pneg %p253
        $region34: #{encoder_forward.2} parent=11 // pred_check_branch
          %460 = sbr.rel (%p458) target = $region36
        $region35: #{encoder_forward.2} parent=11 // pred_region
          %s462 = ssub.s32 256, 256
          %463 = vsyncadd [#allocation19], %s462
          %s464 = sshll.u32 [#allocation20], 4
          %s465 = int_to_ptr.vmem [resolvable:$true] %s464
          %470 = dma.hbm_to_vmem [thread:$0]  %s8, 256, %s465, [#allocation19], 64, 64, 4
        $region36: #{encoder_forward.2} parent=11 // pred_fallthru
          _
        // Predicated region
        $region37: #{encoder_forward.2} parent=11 // pred_check
          %p471 = pneg %p274
        $region38: #{encoder_forward.2} parent=11 // pred_check_branch
          %473 = sbr.rel (%p471) target = $region40
        $region39: #{encoder_forward.2} parent=11 // pred_region
          %s475 = ssub.s32 16, 16
          %476 = vsyncadd [#allocation22], %s475
          %s478 = sshll.u32 [#allocation21], 4
          %s479 = int_to_ptr.vmem [resolvable:$true] %s478
          %481 = dma.hbm_to_vmem [thread:$0]  %s9, 16, %s479, [#allocation22]
        $region40: #{encoder_forward.2} parent=11 // pred_fallthru
          _
        // Predicated region
        $region41: #{encoder_forward.2} parent=11 // pred_check
          %p482 = pneg %p295
        $region42: #{encoder_forward.2} parent=11 // pred_check_branch
          %484 = sbr.rel (%p482) target = $region44
        $region43: #{encoder_forward.2} parent=11 // pred_region
          %s486 = ssub.s32 1024, 1024
          %487 = vsyncadd [#allocation22], %s486
          %s488 = sshll.u32 [#allocation23], 4
          %s489 = int_to_ptr.vmem [resolvable:$true] %s488
          %494 = dma.hbm_to_vmem [thread:$0]  %s10, 1024, %s489, [#allocation22], 64, 64, 4
        $region44: #{encoder_forward.2} parent=11 // pred_fallthru
          _
        // Predicated region
        $region45: #{encoder_forward.2} parent=11 // pred_check
          %p495 = pneg %p316
        $region46: #{encoder_forward.2} parent=11 // pred_check_branch
          %497 = sbr.rel (%p495) target = $region48
        $region47: #{encoder_forward.2} parent=11 // pred_region
          %s499 = ssub.s32 16, 16
          %500 = vsyncadd [#allocation25], %s499
          %s502 = sshll.u32 [#allocation24], 4
          %s503 = int_to_ptr.vmem [resolvable:$true] %s502
          %505 = dma.hbm_to_vmem [thread:$0]  %s11, 16, %s503, [#allocation25]
        $region48: #{encoder_forward.2} parent=11 // pred_fallthru
          _
        // Predicated region
        $region49: #{encoder_forward.2} parent=11 // pred_check
          %p506 = pneg %p337
        $region50: #{encoder_forward.2} parent=11 // pred_check_branch
          %508 = sbr.rel (%p506) target = $region52
        $region51: #{encoder_forward.2} parent=11 // pred_region
          %s510 = ssub.s32 16, 16
          %511 = vsyncadd [#allocation25], %s510
          %s513 = sshll.u32 [#allocation26], 4
          %s514 = int_to_ptr.vmem [resolvable:$true] %s513
          %516 = dma.hbm_to_vmem [thread:$0]  %s12, 16, %s514, [#allocation25]
        $region52: #{encoder_forward.2} parent=11 // pred_fallthru
          _
        // Predicated region
        $region53: #{encoder_forward.2} parent=11 // pred_check
          %p517 = pneg %p358
        $region54: #{encoder_forward.2} parent=11 // pred_check_branch
          %519 = sbr.rel (%p517) target = $region56
        $region55: #{encoder_forward.2} parent=11 // pred_region
          %s521 = ssub.s32 16, 16
          %522 = vsyncadd [#allocation28], %s521
          %s524 = sshll.u32 [#allocation27], 4
          %s525 = int_to_ptr.vmem [resolvable:$true] %s524
          %527 = dma.hbm_to_vmem [thread:$0]  %s13, 16, %s525, [#allocation28]
        $region56: #{encoder_forward.2} parent=11 // pred_fallthru
          _
      $region12: #{encoder_forward.2} parent=5 // pred_fallthru
        _
      %p528 = scmp.lt.s32.totalorder %s35, 2
      // Predicated region
      $region57: #{encoder_forward.2} parent=5 // pred_check
        %p529 = pneg %p528
      $region58: #{encoder_forward.2} parent=5 // pred_check_branch
        %531 = sbr.rel (%p529) target = $region60
      $region59: #{encoder_forward.2} parent=5 // pred_region
        // Predicated region
        $region61: #{encoder_forward.2} parent=59 // pred_check
          %p532 = pneg %p69
        $region62: #{encoder_forward.2} parent=59 // pred_check_branch
          %534 = sbr.rel (%p532) target = $region64
        $region63: #{encoder_forward.2} parent=59 // pred_region
          %s535 = sand.u32 %s59, 1
          %s536 = scalar_lea.sflag [#allocation7], %s535
          %s537 = sand.u32 %s59, 1
          %s538 = smul.addr %s537, 8
          %s539 = scalar_lea.vmem [#allocation6], %s538
          %s541 = ssub.s32 128, 128
          %542 = vsyncadd %s536, %s541
          %s543 = sadd.s32 %s43, %s42
          %s544 = smul.addr %s543, 128
          %s545 = scalar_lea.hbm %s0, %s544
          %s547 = sshll.u32 %s539, 4
          %s548 = int_to_ptr.vmem [resolvable:$true] %s547
          %550 = dma.hbm_to_vmem [thread:$0]  %s545, 128, %s548, %s536
        $region64: #{encoder_forward.2} parent=59 // pred_fallthru
          _
        // Predicated region
        $region65: #{encoder_forward.2} parent=59 // pred_check
          %p551 = pneg %p95
        $region66: #{encoder_forward.2} parent=59 // pred_check_branch
          %553 = sbr.rel (%p551) target = $region68
        $region67: #{encoder_forward.2} parent=59 // pred_region
          %s554 = sand.u32 %s35, 1
          %s555 = scalar_lea.sflag [#allocation10], %s554
          %s556 = sand.u32 %s85, 1
          %s557 = smul.addr %s556, 16
          %s558 = scalar_lea.vmem [#allocation9], %s557
          %s560 = ssub.s32 256, 256
          %561 = vsyncadd %s555, %s560
          %s562 = smul.addr %s42, 4
          %s563 = smul.addr %s562, 64
          %s564 = scalar_lea.hbm %s1, %s563
          %s565 = sshll.u32 %s558, 4
          %s566 = int_to_ptr.vmem [resolvable:$true] %s565
          %571 = dma.hbm_to_vmem [thread:$0]  %s564, 256, %s566, %s555, 64, 64, 4
        $region68: #{encoder_forward.2} parent=59 // pred_fallthru
          _
        // Predicated region
        $region69: #{encoder_forward.2} parent=59 // pred_check
          %p572 = pneg %p121
        $region70: #{encoder_forward.2} parent=59 // pred_check_branch
          %574 = sbr.rel (%p572) target = $region72
        $region71: #{encoder_forward.2} parent=59 // pred_region
          %s575 = sand.u32 %s35, 1
          %s576 = scalar_lea.sflag [#allocation10], %s575
          %s577 = sand.u32 %s111, 1
          %s578 = scalar_lea.vmem [#allocation11], %s577
          %s580 = ssub.s32 16, 16
          %581 = vsyncadd %s576, %s580
          %s582 = smul.addr %s42, 16
          %s583 = scalar_lea.hbm %s2, %s582
          %s585 = sshll.u32 %s578, 4
          %s586 = int_to_ptr.vmem [resolvable:$true] %s585
          %588 = dma.hbm_to_vmem [thread:$0]  %s583, 16, %s586, %s576
        $region72: #{encoder_forward.2} parent=59 // pred_fallthru
          _
      $region60: #{encoder_forward.2} parent=5 // pred_fallthru
        _
      %p589 = scmp.le.s32.totalorder 1, %s35
      %p590 = scmp.lt.s32.totalorder %s35, 3
      %p591 = pnand %p589, %p590
      %p592 = pneg %p591
      // Predicated region
      $region73: #{encoder_forward.2} parent=5 // pred_check
        _
      $region74: #{encoder_forward.2} parent=5 // pred_check_branch
        %594 = sbr.rel (%p591) target = $region76
      $region75: #{encoder_forward.2} parent=5 // pred_region
        %s595 = ssub.s32 %s35, 1
        %s596 = sand.u32 %s62, 1
        %s597 = scalar_lea.sflag [#allocation7], %s596
        %s598 = sand.u32 %s62, 1
        %s599 = smul.addr %s598, 8
        %s600 = scalar_lea.vmem [#allocation6], %s599
        // Predicated region
        $region77: #{encoder_forward.2} parent=75 // pred_check
          %p601 = pneg %p75
        $region78: #{encoder_forward.2} parent=75 // pred_check_branch
          %603 = sbr.rel (%p601) target = $region80
        $region79: #{encoder_forward.2} parent=75 // pred_region
          %604 = dma.done %s597, 128
        $region80: #{encoder_forward.2} parent=75 // pred_fallthru
          _
        %s605 = sand.u32 %s40, 1
        %s606 = scalar_lea.sflag [#allocation10], %s605
        %s607 = sand.u32 %s88, 1
        %s608 = smul.addr %s607, 16
        %s609 = scalar_lea.vmem [#allocation9], %s608
        // Predicated region
        $region81: #{encoder_forward.2} parent=75 // pred_check
          %p610 = pneg %p101
        $region82: #{encoder_forward.2} parent=75 // pred_check_branch
          %612 = sbr.rel (%p610) target = $region84
        $region83: #{encoder_forward.2} parent=75 // pred_region
          %613 = dma.done %s606, 256
        $region84: #{encoder_forward.2} parent=75 // pred_fallthru
          _
        %s614 = sand.u32 %s40, 1
        %s615 = scalar_lea.sflag [#allocation10], %s614
        %s616 = sand.u32 %s114, 1
        %s617 = scalar_lea.vmem [#allocation11], %s616
        // Predicated region
        $region85: #{encoder_forward.2} parent=75 // pred_check
          %p618 = pneg %p127
        $region86: #{encoder_forward.2} parent=75 // pred_check_branch
          %620 = sbr.rel (%p618) target = $region88
        $region87: #{encoder_forward.2} parent=75 // pred_region
          %621 = dma.done %s615, 16
        $region88: #{encoder_forward.2} parent=75 // pred_fallthru
          _
        // Predicated region
        $region89: #{encoder_forward.2} parent=75 // pred_check
          %p622 = pneg %p148
        $region90: #{encoder_forward.2} parent=75 // pred_check_branch
          %624 = sbr.rel (%p622) target = $region92
        $region91: #{encoder_forward.2} parent=75 // pred_region
          %625 = dma.done [#allocation13], 64
        $region92: #{encoder_forward.2} parent=75 // pred_fallthru
          _
        // Predicated region
        $region93: #{encoder_forward.2} parent=75 // pred_check
          %p626 = pneg %p169
        $region94: #{encoder_forward.2} parent=75 // pred_check_branch
          %628 = sbr.rel (%p626) target = $region96
        $region95: #{encoder_forward.2} parent=75 // pred_region
          %629 = dma.done [#allocation13], 256
        $region96: #{encoder_forward.2} parent=75 // pred_fallthru
          _
        // Predicated region
        $region97: #{encoder_forward.2} parent=75 // pred_check
          %p630 = pneg %p190
        $region98: #{encoder_forward.2} parent=75 // pred_check_branch
          %632 = sbr.rel (%p630) target = $region100
        $region99: #{encoder_forward.2} parent=75 // pred_region
          %633 = dma.done [#allocation16], 16
        $region100: #{encoder_forward.2} parent=75 // pred_fallthru
          _
        // Predicated region
        $region101: #{encoder_forward.2} parent=75 // pred_check
          %p634 = pneg %p211
        $region102: #{encoder_forward.2} parent=75 // pred_check_branch
          %636 = sbr.rel (%p634) target = $region104
        $region103: #{encoder_forward.2} parent=75 // pred_region
          %637 = dma.done [#allocation16], 16
        $region104: #{encoder_forward.2} parent=75 // pred_fallthru
          _
        // Predicated region
        $region105: #{encoder_forward.2} parent=75 // pred_check
          %p638 = pneg %p232
        $region106: #{encoder_forward.2} parent=75 // pred_check_branch
          %640 = sbr.rel (%p638) target = $region108
        $region107: #{encoder_forward.2} parent=75 // pred_region
          %641 = dma.done [#allocation19], 16
        $region108: #{encoder_forward.2} parent=75 // pred_fallthru
          _
        // Predicated region
        $region109: #{encoder_forward.2} parent=75 // pred_check
          %p642 = pneg %p253
        $region110: #{encoder_forward.2} parent=75 // pred_check_branch
          %644 = sbr.rel (%p642) target = $region112
        $region111: #{encoder_forward.2} parent=75 // pred_region
          %645 = dma.done [#allocation19], 256
        $region112: #{encoder_forward.2} parent=75 // pred_fallthru
          _
        // Predicated region
        $region113: #{encoder_forward.2} parent=75 // pred_check
          %p646 = pneg %p274
        $region114: #{encoder_forward.2} parent=75 // pred_check_branch
          %648 = sbr.rel (%p646) target = $region116
        $region115: #{encoder_forward.2} parent=75 // pred_region
          %649 = dma.done [#allocation22], 16
        $region116: #{encoder_forward.2} parent=75 // pred_fallthru
          _
        // Predicated region
        $region117: #{encoder_forward.2} parent=75 // pred_check
          %p650 = pneg %p295
        $region118: #{encoder_forward.2} parent=75 // pred_check_branch
          %652 = sbr.rel (%p650) target = $region120
        $region119: #{encoder_forward.2} parent=75 // pred_region
          %653 = dma.done [#allocation22], 1024
        $region120: #{encoder_forward.2} parent=75 // pred_fallthru
          _
        // Predicated region
        $region121: #{encoder_forward.2} parent=75 // pred_check
          %p654 = pneg %p316
        $region122: #{encoder_forward.2} parent=75 // pred_check_branch
          %656 = sbr.rel (%p654) target = $region124
        $region123: #{encoder_forward.2} parent=75 // pred_region
          %657 = dma.done [#allocation25], 16
        $region124: #{encoder_forward.2} parent=75 // pred_fallthru
          _
        // Predicated region
        $region125: #{encoder_forward.2} parent=75 // pred_check
          %p658 = pneg %p337
        $region126: #{encoder_forward.2} parent=75 // pred_check_branch
          %660 = sbr.rel (%p658) target = $region128
        $region127: #{encoder_forward.2} parent=75 // pred_region
          %661 = dma.done [#allocation25], 16
        $region128: #{encoder_forward.2} parent=75 // pred_fallthru
          _
        // Predicated region
        $region129: #{encoder_forward.2} parent=75 // pred_check
          %p662 = pneg %p358
        $region130: #{encoder_forward.2} parent=75 // pred_check_branch
          %664 = sbr.rel (%p662) target = $region132
        $region131: #{encoder_forward.2} parent=75 // pred_region
          %665 = dma.done [#allocation28], 16
        $region132: #{encoder_forward.2} parent=75 // pred_fallthru
          _
        %s666 = sand.u32 %s62, 1
        %s667 = scalar_lea.sflag [#allocation7], %s666
        %s668 = sand.u32 %s62, 1
        %s669 = smul.addr %s668, 8
        %s670 = scalar_lea.vmem [#allocation6], %s669
        %p671 = pneg %p75
        %p672 = pneg %p72
        %s673 = sand.u32 %s40, 1
        %s674 = scalar_lea.sflag [#allocation10], %s673
        %s675 = sand.u32 %s88, 1
        %s676 = smul.addr %s675, 16
        %s677 = scalar_lea.vmem [#allocation9], %s676
        %p678 = pneg %p101
        %p679 = pneg %p98
        %s680 = sand.u32 %s40, 1
        %s681 = scalar_lea.sflag [#allocation10], %s680
        %s682 = sand.u32 %s114, 1
        %s683 = scalar_lea.vmem [#allocation11], %s682
        %p684 = pneg %p127
        %p685 = pneg %p124
        %p686 = pneg %p148
        %p687 = pneg %p145
        %p688 = pneg %p169
        %p689 = pneg %p166
        %p690 = pneg %p190
        %p691 = pneg %p187
        %p692 = pneg %p211
        %p693 = pneg %p208
        %p694 = pneg %p232
        %p695 = pneg %p229
        %p696 = pneg %p253
        %p697 = pneg %p250
        %p698 = pneg %p274
        %p699 = pneg %p271
        %p700 = pneg %p295
        %p701 = pneg %p292
        %p702 = pneg %p316
        %p703 = pneg %p313
        %p704 = pneg %p337
        %p705 = pneg %p334
        %p706 = pneg %p358
        %p707 = pneg %p355
        %p708 = pneg %p386
        %p709 = pneg %p383
        %s710 = sand.u32 %s373, 1
        %s711 = scalar_lea.sflag [#allocation8], %s710
        %s712 = sand.u32 %s373, 1
        %s713 = smul.addr %s712, 8
        %s714 = scalar_lea.vmem [#allocation29], %s713
        %p716 = scmp.eq.s32.totalorder %s45, 0
        // Predicated region
        $region133: #{encoder_forward.2} parent=75 // pred_check
          %p717 = pneg %p716
        $region134: #{encoder_forward.2} parent=75 // pred_check_branch
          %719 = sbr.rel (%p717) target = $region136
        $region135: #{encoder_forward.2} parent=75 // pred_region
          %v720 = vld [vmem:[%s609] sm:$0xf]
          %v721 = vld [vmem:[%s609 + $0x4] sm:$0xf]
          %v722 = vld [vmem:[%s609 + $0x8] sm:$0xf]
          %v723 = vld [vmem:[%s609 + $0xc] sm:$0xf]
          %v724 = vld [vmem:[#allocation12] sm:$0xf]
          %v729 = vunpack.c.l.b16 %v720
          %v730 = vunpack.c.l.b16 %v721
          %v731 = vunpack.c.l.b16 %v722
          %v732 = vunpack.c.l.b16 %v723
          %v733 = vpack.c.b16 %v730, %v729
          %v734 = vpack.c.b16 %v732, %v731
          %vm735 = vcmask 64512
          %v737 = vsel %vm735, %v733, 0
          %v740 = vsel %vm735, %v734, 0
          %vm742 = vcmask 1043456
          %v744 = vsel %vm742, %v724, 0
          %746 = vmatprep.subr.bf16.mxu0 0
          %747 = vmatpush1.bf16.msra.mxu0 %v744
          %748 = vmatprep.subr.bf16.mxu0 0
          %749 = vmatpush1.bf16.msra.mxu0 0
          %750 = vmatprep.subr.bf16.mxu0 0
          %751 = vmatpush1.bf16.msra.mxu0 0
          %752 = vmatprep.subr.bf16.mxu0 0
          %753 = vmatpush1.bf16.msra.mxu0 0
          %754 = vmatprep.subr.bf16.mxu0 0
          %755 = vmatpush1.bf16.msra.mxu0 0
          %756 = vmatprep.subr.bf16.mxu0 0
          %757 = vmatpush1.bf16.msra.mxu0 0
          %758 = vmatprep.subr.bf16.mxu0 0
          %759 = vmatpush1.bf16.msra.mxu0 0
          %760 = vmatprep.subr.bf16.mxu0 0
          %761 = vmatpush1.bf16.msra.mxu0 0
          %762 = vmatprep.subr.bf16.mxu0 0
          %763 = vmatpush1.bf16.msra.mxu0 0
          %764 = vmatprep.subr.bf16.mxu0 0
          %765 = vmatpush1.bf16.msra.mxu0 0
          %766 = vmatprep.subr.bf16.mxu0 0
          %767 = vmatpush1.bf16.msra.mxu0 0
          %768 = vmatprep.subr.bf16.mxu0 0
          %769 = vmatpush1.bf16.msra.mxu0 0
          %770 = vmatprep.subr.bf16.mxu0 0
          %771 = vmatpush1.bf16.msra.mxu0 0
          %772 = vmatprep.subr.bf16.mxu0 0
          %773 = vmatpush1.bf16.msra.mxu0 0
          %774 = vmatprep.subr.bf16.mxu0 0
          %775 = vmatpush1.bf16.msra.mxu0 0
          %776 = vmatprep.subr.bf16.mxu0 0
          %777 = vmatpush1.bf16.msra.mxu0 0
          %778 = vmatprep.mubr.bf16.mxu0 0
          %779 = vmatmul.mubr.bf16.gmra.mrb[0].mxu0 %v737
          %v780 = vpop.f32.mrb[0].mxu0
          %v781 = vadd.f32 0.0, %v780
          %v782 = vpop.f32.mrb[0].mxu0
          %v783 = vpop.f32.mrb[0].mxu0
          %v784 = vadd.f32 0.0, %v783
          %v785 = vpop.f32.mrb[0].mxu0
          %786 = vmatprep.mubr.bf16.mxu0 0
          %787 = vmatmul.mubr.bf16.gmra.mrb[0].mxu0 %v740
          %v788 = vpop.f32.mrb[0].mxu0
          %v789 = vadd.f32 0.0, %v788
          %v790 = vpop.f32.mrb[0].mxu0
          %v791 = vpop.f32.mrb[0].mxu0
          %v792 = vadd.f32 0.0, %v791
          %v793 = vpop.f32.mrb[0].mxu0
          %794 = vdwg.mxu0
          %v795 = vmul.f32 %v781, 0.17677669
          %v796 = vpack.c.bf16 %v795, %v795
          %vm797 = vcmask 60416
          %798 = vst.msk [vmem:[#allocation2] sm:$0xf] %vm797, %v796
          %v799 = vpack.c.bf16 %v781, %v781
          %v801 = vunpack.c.l.b16 %v799
          %v802 = vpack.c.b16 %v801, %v801
          %803 = vrot.lane.b32.xlu0 %v802, 120
          %v804 = vpop.permute.xlu0 %803
          %806 = vst.msk [vmem:[#allocation3] sm:$0xf] %vm797, %v804
          %807 = vrot.lane.b32.xlu0 %v802, 112
          %v808 = vpop.permute.xlu0 %807
          %810 = vst.msk [vmem:[#allocation4] sm:$0xf] %vm797, %v808
          %v811 = vmul.f32 %v784, 0.17677669
          %v812 = vpack.c.bf16 %v811, %v811
          %s813 = scalar_lea.vmem [#allocation2], 4
          %814 = vst.msk [vmem:[%s813] sm:$0xf] %vm797, %v812
          %v815 = vpack.c.bf16 %v784, %v784
          %v817 = vunpack.c.l.b16 %v815
          %v818 = vpack.c.b16 %v817, %v817
          %819 = vrot.lane.b32.xlu0 %v818, 120
          %v820 = vpop.permute.xlu0 %819
          %s822 = scalar_lea.vmem [#allocation3], 4
          %823 = vst.msk [vmem:[%s822] sm:$0xf] %vm797, %v820
          %824 = vrot.lane.b32.xlu0 %v818, 112
          %v825 = vpop.permute.xlu0 %824
          %s827 = scalar_lea.vmem [#allocation4], 4
          %828 = vst.msk [vmem:[%s827] sm:$0xf] %vm797, %v825
          %v829 = vmul.f32 %v789, 0.17677669
          %v830 = vpack.c.bf16 %v829, %v829
          %s831 = scalar_lea.vmem [#allocation2], 8
          %832 = vst.msk [vmem:[%s831] sm:$0xf] %vm797, %v830
          %v833 = vpack.c.bf16 %v789, %v789
          %v835 = vunpack.c.l.b16 %v833
          %v836 = vpack.c.b16 %v835, %v835
          %837 = vrot.lane.b32.xlu0 %v836, 120
          %v838 = vpop.permute.xlu0 %837
          %s840 = scalar_lea.vmem [#allocation3], 8
          %841 = vst.msk [vmem:[%s840] sm:$0xf] %vm797, %v838
          %842 = vrot.lane.b32.xlu0 %v836, 112
          %v843 = vpop.permute.xlu0 %842
          %s845 = scalar_lea.vmem [#allocation4], 8
          %846 = vst.msk [vmem:[%s845] sm:$0xf] %vm797, %v843
          %v847 = vmul.f32 %v792, 0.17677669
          %v848 = vpack.c.bf16 %v847, %v847
          %s849 = scalar_lea.vmem [#allocation2], 12
          %850 = vst.msk [vmem:[%s849] sm:$0xf] %vm797, %v848
          %v851 = vpack.c.bf16 %v792, %v792
          %v853 = vunpack.c.l.b16 %v851
          %v854 = vpack.c.b16 %v853, %v853
          %855 = vrot.lane.b32.xlu0 %v854, 120
          %v856 = vpop.permute.xlu0 %855
          %s858 = scalar_lea.vmem [#allocation3], 12
          %859 = vst.msk [vmem:[%s858] sm:$0xf] %vm797, %v856
          %860 = vrot.lane.b32.xlu0 %v854, 112
          %v861 = vpop.permute.xlu0 %860
          %s863 = scalar_lea.vmem [#allocation4], 12
          %864 = vst.msk [vmem:[%s863] sm:$0xf] %vm797, %v861
        $region136: #{encoder_forward.2} parent=75 // pred_fallthru
          _
        %s865 = smul.u32 %s45, 8
        %s866 = sshra.s32 %s865, 3
        %s867 = sand.u32 %s865, 7
        %s868 = smul.addr %s866, 4
        %s869 = scalar_lea.vmem [#allocation2], %s868
        %v870 = vld [vmem:[%s869] sm:$0xf]
        %v871 = vld [vmem:[%s869 + $0x4] sm:$0xf]
        %v872 = vld [vmem:[%s869 + $0x8] sm:$0xf]
        %v873 = vld [vmem:[%s869 + $0xc] sm:$0xf]
        %v874 = vld [vmem:[%s617] sm:$0x1]
        %vm875 = vcmp.eq.f32.partialorder %v874, 0.0
        %v876 = vsel %vm875, -1.767767e+19, 0.0
        %v877 = vld [vmem:[#allocation3] sm:$0xf]
        %v878 = vld [vmem:[#allocation3 + $0x4] sm:$0xf]
        %v879 = vld [vmem:[#allocation3 + $0x8] sm:$0xf]
        %v880 = vld [vmem:[#allocation3 + $0xc] sm:$0xf]
        %v882 = vlaneseq
        %v883 = vshrl.u32 %v882, 7
        %v884 = vsub.s32 0, %v883
        %v885 = vrot.slane %v876, %v884
        %vm887 = vcmask 64512
        %v889 = vsel %vm887, %v870, 0
        %v892 = vsel %vm887, %v877, 0
        %894 = vmatprep.subr.bf16.mxu0 0
        %895 = vmatpush1.bf16.xpose.msra.mxu0 %v892
        %896 = vmatprep.subr.bf16.mxu0 0
        %897 = vmatpush1.bf16.xpose.msra.mxu0 0
        %898 = vmatprep.subr.bf16.mxu0 0
        %899 = vmatpush1.bf16.xpose.msra.mxu0 0
        %900 = vmatprep.subr.bf16.mxu0 0
        %901 = vmatpush1.bf16.xpose.msra.mxu0 0
        %902 = vmatprep.subr.bf16.mxu0 0
        %903 = vmatpush1.bf16.xpose.msra.mxu0 0
        %904 = vmatprep.subr.bf16.mxu0 0
        %905 = vmatpush1.bf16.xpose.msra.mxu0 0
        %906 = vmatprep.subr.bf16.mxu0 0
        %907 = vmatpush1.bf16.xpose.msra.mxu0 0
        %908 = vmatprep.subr.bf16.mxu0 0
        %909 = vmatpush1.bf16.xpose.msra.mxu0 0
        %910 = vmatprep.subr.bf16.mxu0 0
        %911 = vmatpush1.bf16.xpose.msra.mxu0 0
        %912 = vmatprep.subr.bf16.mxu0 0
        %913 = vmatpush1.bf16.xpose.msra.mxu0 0
        %914 = vmatprep.subr.bf16.mxu0 0
        %915 = vmatpush1.bf16.xpose.msra.mxu0 0
        %916 = vmatprep.subr.bf16.mxu0 0
        %917 = vmatpush1.bf16.xpose.msra.mxu0 0
        %918 = vmatprep.subr.bf16.mxu0 0
        %919 = vmatpush1.bf16.xpose.msra.mxu0 0
        %920 = vmatprep.subr.bf16.mxu0 0
        %921 = vmatpush1.bf16.xpose.msra.mxu0 0
        %922 = vmatprep.subr.bf16.mxu0 0
        %923 = vmatpush1.bf16.xpose.msra.mxu0 0
        %924 = vmatprep.subr.bf16.mxu0 0
        %925 = vmatpush1.bf16.xpose.msra.mxu0 0
        %926 = vmatprep.mubr.bf16.mxu0 0
        %927 = vmatmul.mubr.bf16.gmra.mrb[0].mxu0 %v889
        %v928 = vpop.f32.mrb[0].mxu0
        %v929 = vadd.f32 %v885, %v928
        %v930 = vpop.f32.mrb[0].mxu0
        %v931 = vpop.f32.mrb[0].mxu0
        %v932 = vpop.f32.mrb[0].mxu0
        %933 = vdwg.mxu0
        %v935 = vsel %vm887, %v871, 0
        %v938 = vsel %vm887, %v878, 0
        %940 = vmatprep.subr.bf16.mxu0 0
        %941 = vmatpush1.bf16.xpose.msra.mxu0 %v938
        %942 = vmatprep.subr.bf16.mxu0 0
        %943 = vmatpush1.bf16.xpose.msra.mxu0 0
        %944 = vmatprep.subr.bf16.mxu0 0
        %945 = vmatpush1.bf16.xpose.msra.mxu0 0
        %946 = vmatprep.subr.bf16.mxu0 0
        %947 = vmatpush1.bf16.xpose.msra.mxu0 0
        %948 = vmatprep.subr.bf16.mxu0 0
        %949 = vmatpush1.bf16.xpose.msra.mxu0 0
        %950 = vmatprep.subr.bf16.mxu0 0
        %951 = vmatpush1.bf16.xpose.msra.mxu0 0
        %952 = vmatprep.subr.bf16.mxu0 0
        %953 = vmatpush1.bf16.xpose.msra.mxu0 0
        %954 = vmatprep.subr.bf16.mxu0 0
        %955 = vmatpush1.bf16.xpose.msra.mxu0 0
        %956 = vmatprep.subr.bf16.mxu0 0
        %957 = vmatpush1.bf16.xpose.msra.mxu0 0
        %958 = vmatprep.subr.bf16.mxu0 0
        %959 = vmatpush1.bf16.xpose.msra.mxu0 0
        %960 = vmatprep.subr.bf16.mxu0 0
        %961 = vmatpush1.bf16.xpose.msra.mxu0 0
        %962 = vmatprep.subr.bf16.mxu0 0
        %963 = vmatpush1.bf16.xpose.msra.mxu0 0
        %964 = vmatprep.subr.bf16.mxu0 0
        %965 = vmatpush1.bf16.xpose.msra.mxu0 0
        %966 = vmatprep.subr.bf16.mxu0 0
        %967 = vmatpush1.bf16.xpose.msra.mxu0 0
        %968 = vmatprep.subr.bf16.mxu0 0
        %969 = vmatpush1.bf16.xpose.msra.mxu0 0
        %970 = vmatprep.subr.bf16.mxu0 0
        %971 = vmatpush1.bf16.xpose.msra.mxu0 0
        %972 = vmatprep.mubr.bf16.mxu0 0
        %973 = vmatmul.mubr.bf16.gmra.mrb[0].mxu0 %v935
        %v974 = vpop.f32.mrb[0].mxu0
        %v975 = vadd.f32 %v885, %v974
        %v976 = vpop.f32.mrb[0].mxu0
        %v977 = vpop.f32.mrb[0].mxu0
        %v978 = vpop.f32.mrb[0].mxu0
        %979 = vdwg.mxu0
        %v981 = vsel %vm887, %v872, 0
        %v984 = vsel %vm887, %v879, 0
        %986 = vmatprep.subr.bf16.mxu0 0
        %987 = vmatpush1.bf16.xpose.msra.mxu0 %v984
        %988 = vmatprep.subr.bf16.mxu0 0
        %989 = vmatpush1.bf16.xpose.msra.mxu0 0
        %990 = vmatprep.subr.bf16.mxu0 0
        %991 = vmatpush1.bf16.xpose.msra.mxu0 0
        %992 = vmatprep.subr.bf16.mxu0 0
        %993 = vmatpush1.bf16.xpose.msra.mxu0 0
        %994 = vmatprep.subr.bf16.mxu0 0
        %995 = vmatpush1.bf16.xpose.msra.mxu0 0
        %996 = vmatprep.subr.bf16.mxu0 0
        %997 = vmatpush1.bf16.xpose.msra.mxu0 0
        %998 = vmatprep.subr.bf16.mxu0 0
        %999 = vmatpush1.bf16.xpose.msra.mxu0 0
        %1000 = vmatprep.subr.bf16.mxu0 0
        %1001 = vmatpush1.bf16.xpose.msra.mxu0 0
        %1002 = vmatprep.subr.bf16.mxu0 0
        %1003 = vmatpush1.bf16.xpose.msra.mxu0 0
        %1004 = vmatprep.subr.bf16.mxu0 0
        %1005 = vmatpush1.bf16.xpose.msra.mxu0 0
        %1006 = vmatprep.subr.bf16.mxu0 0
        %1007 = vmatpush1.bf16.xpose.msra.mxu0 0
        %1008 = vmatprep.subr.bf16.mxu0 0
        %1009 = vmatpush1.bf16.xpose.msra.mxu0 0
        %1010 = vmatprep.subr.bf16.mxu0 0
        %1011 = vmatpush1.bf16.xpose.msra.mxu0 0
        %1012 = vmatprep.subr.bf16.mxu0 0
        %1013 = vmatpush1.bf16.xpose.msra.mxu0 0
        %1014 = vmatprep.subr.bf16.mxu0 0
        %1015 = vmatpush1.bf16.xpose.msra.mxu0 0
        %1016 = vmatprep.subr.bf16.mxu0 0
        %1017 = vmatpush1.bf16.xpose.msra.mxu0 0
        %1018 = vmatprep.mubr.bf16.mxu0 0
        %1019 = vmatmul.mubr.bf16.gmra.mrb[0].mxu0 %v981
        %v1020 = vpop.f32.mrb[0].mxu0
        %v1021 = vadd.f32 %v885, %v1020
        %v1022 = vpop.f32.mrb[0].mxu0
        %v1023 = vpop.f32.mrb[0].mxu0
        %v1024 = vpop.f32.mrb[0].mxu0
        %1025 = vdwg.mxu0
        %v1027 = vsel %vm887, %v873, 0
        %v1030 = vsel %vm887, %v880, 0
        %1032 = vmatprep.subr.bf16.mxu0 0
        %1033 = vmatpush1.bf16.xpose.msra.mxu0 %v1030
        %1034 = vmatprep.subr.bf16.mxu0 0
        %1035 = vmatpush1.bf16.xpose.msra.mxu0 0
        %1036 = vmatprep.subr.bf16.mxu0 0
        %1037 = vmatpush1.bf16.xpose.msra.mxu0 0
        %1038 = vmatprep.subr.bf16.mxu0 0
        %1039 = vmatpush1.bf16.xpose.msra.mxu0 0
        %1040 = vmatprep.subr.bf16.mxu0 0
        %1041 = vmatpush1.bf16.xpose.msra.mxu0 0
        %1042 = vmatprep.subr.bf16.mxu0 0
        %1043 = vmatpush1.bf16.xpose.msra.mxu0 0
        %1044 = vmatprep.subr.bf16.mxu0 0
        %1045 = vmatpush1.bf16.xpose.msra.mxu0 0
        %1046 = vmatprep.subr.bf16.mxu0 0
        %1047 = vmatpush1.bf16.xpose.msra.mxu0 0
        %1048 = vmatprep.subr.bf16.mxu0 0
        %1049 = vmatpush1.bf16.xpose.msra.mxu0 0
        %1050 = vmatprep.subr.bf16.mxu0 0
        %1051 = vmatpush1.bf16.xpose.msra.mxu0 0
        %1052 = vmatprep.subr.bf16.mxu0 0
        %1053 = vmatpush1.bf16.xpose.msra.mxu0 0
        %1054 = vmatprep.subr.bf16.mxu0 0
        %1055 = vmatpush1.bf16.xpose.msra.mxu0 0
        %1056 = vmatprep.subr.bf16.mxu0 0
        %1057 = vmatpush1.bf16.xpose.msra.mxu0 0
        %1058 = vmatprep.subr.bf16.mxu0 0
        %1059 = vmatpush1.bf16.xpose.msra.mxu0 0
        %1060 = vmatprep.subr.bf16.mxu0 0
        %1061 = vmatpush1.bf16.xpose.msra.mxu0 0
        %1062 = vmatprep.subr.bf16.mxu0 0
        %1063 = vmatpush1.bf16.xpose.msra.mxu0 0
        %1064 = vmatprep.mubr.bf16.mxu0 0
        %1065 = vmatmul.mubr.bf16.gmra.mrb[0].mxu0 %v1027
        %v1066 = vpop.f32.mrb[0].mxu0
        %v1067 = vadd.f32 %v885, %v1066
        %v1068 = vpop.f32.mrb[0].mxu0
        %v1069 = vpop.f32.mrb[0].mxu0
        %v1070 = vpop.f32.mrb[0].mxu0
        %1071 = vdwg.mxu0
        %v1072 = vsel %vm887, %v929, -inf
        %1073 = vmax.xlane.f32.xlu0 %v1072
        %v1074 = vpop.xlane.xlu0 %1073
        %v1075 = vsel %vm887, %v975, -inf
        %1076 = vmax.xlane.f32.xlu0 %v1075
        %v1077 = vpop.xlane.xlu0 %1076
        %v1078 = vsel %vm887, %v1021, -inf
        %1079 = vmax.xlane.f32.xlu0 %v1078
        %v1080 = vpop.xlane.xlu0 %1079
        %v1081 = vsel %vm887, %v1067, -inf
        %1082 = vmax.xlane.f32.xlu0 %v1081
        %v1083 = vpop.xlane.xlu0 %1082
        %v1084 = vsub.f32 %v929, %v1074
        %v1085 = vsub.f32 %v975, %v1077
        %v1086 = vsub.f32 %v1021, %v1080
        %v1087 = vsub.f32 %v1067, %v1083
        %v1088 = vmul.f32 %v1084, 1.442695
        %v1089 = vpow.pop %v1088
        %v1090 = vmul.f32 %v1085, 1.442695
        %v1091 = vpow.pop %v1090
        %v1092 = vmul.f32 %v1086, 1.442695
        %v1093 = vpow.pop %v1092
        %v1094 = vmul.f32 %v1087, 1.442695
        %v1095 = vpow.pop %v1094
        %v1096 = vsel %vm887, %v1089, 0.0
        %1097 = vadd.xlane.f32.xlu0 %v1096
        %v1098 = vpop.xlane.xlu0 %1097
        %v1099 = vsel %vm887, %v1091, 0.0
        %1100 = vadd.xlane.f32.xlu0 %v1099
        %v1101 = vpop.xlane.xlu0 %1100
        %v1102 = vsel %vm887, %v1093, 0.0
        %1103 = vadd.xlane.f32.xlu0 %v1102
        %v1104 = vpop.xlane.xlu0 %1103
        %v1105 = vsel %vm887, %v1095, 0.0
        %1106 = vadd.xlane.f32.xlu0 %v1105
        %v1107 = vpop.xlane.xlu0 %1106
        %v1108 = vpack.c.bf16 %v1089, %v1089
        %v1109 = vpack.c.bf16 %v1091, %v1091
        %v1110 = vpack.c.bf16 %v1093, %v1093
        %v1111 = vpack.c.bf16 %v1095, %v1095
        %v1112 = vld [vmem:[#allocation4] sm:$0xf]
        %v1113 = vld [vmem:[#allocation4 + $0x4] sm:$0xf]
        %v1114 = vld [vmem:[#allocation4 + $0x8] sm:$0xf]
        %v1115 = vld [vmem:[#allocation4 + $0xc] sm:$0xf]
        %v1117 = vsel %vm887, %v1108, 0
        %vm1119 = vcmask 1043456
        %v1121 = vsel %vm1119, %v1112, 0
        %1123 = vmatprep.subr.bf16.mxu0 0
        %1124 = vmatpush1.bf16.msra.mxu0 %v1121
        %1125 = vmatprep.subr.bf16.mxu0 0
        %1126 = vmatpush1.bf16.msra.mxu0 0
        %1127 = vmatprep.subr.bf16.mxu0 0
        %1128 = vmatpush1.bf16.msra.mxu0 0
        %1129 = vmatprep.subr.bf16.mxu0 0
        %1130 = vmatpush1.bf16.msra.mxu0 0
        %1131 = vmatprep.subr.bf16.mxu0 0
        %1132 = vmatpush1.bf16.msra.mxu0 0
        %1133 = vmatprep.subr.bf16.mxu0 0
        %1134 = vmatpush1.bf16.msra.mxu0 0
        %1135 = vmatprep.subr.bf16.mxu0 0
        %1136 = vmatpush1.bf16.msra.mxu0 0
        %1137 = vmatprep.subr.bf16.mxu0 0
        %1138 = vmatpush1.bf16.msra.mxu0 0
        %1139 = vmatprep.subr.bf16.mxu0 0
        %1140 = vmatpush1.bf16.msra.mxu0 0
        %1141 = vmatprep.subr.bf16.mxu0 0
        %1142 = vmatpush1.bf16.msra.mxu0 0
        %1143 = vmatprep.subr.bf16.mxu0 0
        %1144 = vmatpush1.bf16.msra.mxu0 0
        %1145 = vmatprep.subr.bf16.mxu0 0
        %1146 = vmatpush1.bf16.msra.mxu0 0
        %1147 = vmatprep.subr.bf16.mxu0 0
        %1148 = vmatpush1.bf16.msra.mxu0 0
        %1149 = vmatprep.subr.bf16.mxu0 0
        %1150 = vmatpush1.bf16.msra.mxu0 0
        %1151 = vmatprep.subr.bf16.mxu0 0
        %1152 = vmatpush1.bf16.msra.mxu0 0
        %1153 = vmatprep.subr.bf16.mxu0 0
        %1154 = vmatpush1.bf16.msra.mxu0 0
        %1155 = vmatprep.mubr.bf16.mxu0 0
        %1156 = vmatmul.mubr.bf16.gmra.mrb[0].mxu0 %v1117
        %v1157 = vpop.f32.mrb[0].mxu0
        %v1158 = vadd.f32 0.0, %v1157
        %v1159 = vpop.f32.mrb[0].mxu0
        %v1160 = vpop.f32.mrb[0].mxu0
        %v1161 = vpop.f32.mrb[0].mxu0
        %1162 = vdwg.mxu0
        %v1164 = vsel %vm887, %v1109, 0
        %v1167 = vsel %vm1119, %v1113, 0
        %1169 = vmatprep.subr.bf16.mxu0 0
        %1170 = vmatpush1.bf16.msra.mxu0 %v1167
        %1171 = vmatprep.subr.bf16.mxu0 0
        %1172 = vmatpush1.bf16.msra.mxu0 0
        %1173 = vmatprep.subr.bf16.mxu0 0
        %1174 = vmatpush1.bf16.msra.mxu0 0
        %1175 = vmatprep.subr.bf16.mxu0 0
        %1176 = vmatpush1.bf16.msra.mxu0 0
        %1177 = vmatprep.subr.bf16.mxu0 0
        %1178 = vmatpush1.bf16.msra.mxu0 0
        %1179 = vmatprep.subr.bf16.mxu0 0
        %1180 = vmatpush1.bf16.msra.mxu0 0
        %1181 = vmatprep.subr.bf16.mxu0 0
        %1182 = vmatpush1.bf16.msra.mxu0 0
        %1183 = vmatprep.subr.bf16.mxu0 0
        %1184 = vmatpush1.bf16.msra.mxu0 0
        %1185 = vmatprep.subr.bf16.mxu0 0
        %1186 = vmatpush1.bf16.msra.mxu0 0
        %1187 = vmatprep.subr.bf16.mxu0 0
        %1188 = vmatpush1.bf16.msra.mxu0 0
        %1189 = vmatprep.subr.bf16.mxu0 0
        %1190 = vmatpush1.bf16.msra.mxu0 0
        %1191 = vmatprep.subr.bf16.mxu0 0
        %1192 = vmatpush1.bf16.msra.mxu0 0
        %1193 = vmatprep.subr.bf16.mxu0 0
        %1194 = vmatpush1.bf16.msra.mxu0 0
        %1195 = vmatprep.subr.bf16.mxu0 0
        %1196 = vmatpush1.bf16.msra.mxu0 0
        %1197 = vmatprep.subr.bf16.mxu0 0
        %1198 = vmatpush1.bf16.msra.mxu0 0
        %1199 = vmatprep.subr.bf16.mxu0 0
        %1200 = vmatpush1.bf16.msra.mxu0 0
        %1201 = vmatprep.mubr.bf16.mxu0 0
        %1202 = vmatmul.mubr.bf16.gmra.mrb[0].mxu0 %v1164
        %v1203 = vpop.f32.mrb[0].mxu0
        %v1204 = vadd.f32 0.0, %v1203
        %v1205 = vpop.f32.mrb[0].mxu0
        %v1206 = vpop.f32.mrb[0].mxu0
        %v1207 = vpop.f32.mrb[0].mxu0
        %1208 = vdwg.mxu0
        %v1210 = vsel %vm887, %v1110, 0
        %v1213 = vsel %vm1119, %v1114, 0
        %1215 = vmatprep.subr.bf16.mxu0 0
        %1216 = vmatpush1.bf16.msra.mxu0 %v1213
        %1217 = vmatprep.subr.bf16.mxu0 0
        %1218 = vmatpush1.bf16.msra.mxu0 0
        %1219 = vmatprep.subr.bf16.mxu0 0
        %1220 = vmatpush1.bf16.msra.mxu0 0
        %1221 = vmatprep.subr.bf16.mxu0 0
        %1222 = vmatpush1.bf16.msra.mxu0 0
        %1223 = vmatprep.subr.bf16.mxu0 0
        %1224 = vmatpush1.bf16.msra.mxu0 0
        %1225 = vmatprep.subr.bf16.mxu0 0
        %1226 = vmatpush1.bf16.msra.mxu0 0
        %1227 = vmatprep.subr.bf16.mxu0 0
        %1228 = vmatpush1.bf16.msra.mxu0 0
        %1229 = vmatprep.subr.bf16.mxu0 0
        %1230 = vmatpush1.bf16.msra.mxu0 0
        %1231 = vmatprep.subr.bf16.mxu0 0
        %1232 = vmatpush1.bf16.msra.mxu0 0
        %1233 = vmatprep.subr.bf16.mxu0 0
        %1234 = vmatpush1.bf16.msra.mxu0 0
        %1235 = vmatprep.subr.bf16.mxu0 0
        %1236 = vmatpush1.bf16.msra.mxu0 0
        %1237 = vmatprep.subr.bf16.mxu0 0
        %1238 = vmatpush1.bf16.msra.mxu0 0
        %1239 = vmatprep.subr.bf16.mxu0 0
        %1240 = vmatpush1.bf16.msra.mxu0 0
        %1241 = vmatprep.subr.bf16.mxu0 0
        %1242 = vmatpush1.bf16.msra.mxu0 0
        %1243 = vmatprep.subr.bf16.mxu0 0
        %1244 = vmatpush1.bf16.msra.mxu0 0
        %1245 = vmatprep.subr.bf16.mxu0 0
        %1246 = vmatpush1.bf16.msra.mxu0 0
        %1247 = vmatprep.mubr.bf16.mxu0 0
        %1248 = vmatmul.mubr.bf16.gmra.mrb[0].mxu0 %v1210
        %v1249 = vpop.f32.mrb[0].mxu0
        %v1250 = vadd.f32 0.0, %v1249
        %v1251 = vpop.f32.mrb[0].mxu0
        %v1252 = vpop.f32.mrb[0].mxu0
        %v1253 = vpop.f32.mrb[0].mxu0
        %1254 = vdwg.mxu0
        %v1256 = vsel %vm887, %v1111, 0
        %v1259 = vsel %vm1119, %v1115, 0
        %1261 = vmatprep.subr.bf16.mxu0 0
        %1262 = vmatpush1.bf16.msra.mxu0 %v1259
        %1263 = vmatprep.subr.bf16.mxu0 0
        %1264 = vmatpush1.bf16.msra.mxu0 0
        %1265 = vmatprep.subr.bf16.mxu0 0
        %1266 = vmatpush1.bf16.msra.mxu0 0
        %1267 = vmatprep.subr.bf16.mxu0 0
        %1268 = vmatpush1.bf16.msra.mxu0 0
        %1269 = vmatprep.subr.bf16.mxu0 0
        %1270 = vmatpush1.bf16.msra.mxu0 0
        %1271 = vmatprep.subr.bf16.mxu0 0
        %1272 = vmatpush1.bf16.msra.mxu0 0
        %1273 = vmatprep.subr.bf16.mxu0 0
        %1274 = vmatpush1.bf16.msra.mxu0 0
        %1275 = vmatprep.subr.bf16.mxu0 0
        %1276 = vmatpush1.bf16.msra.mxu0 0
        %1277 = vmatprep.subr.bf16.mxu0 0
        %1278 = vmatpush1.bf16.msra.mxu0 0
        %1279 = vmatprep.subr.bf16.mxu0 0
        %1280 = vmatpush1.bf16.msra.mxu0 0
        %1281 = vmatprep.subr.bf16.mxu0 0
        %1282 = vmatpush1.bf16.msra.mxu0 0
        %1283 = vmatprep.subr.bf16.mxu0 0
        %1284 = vmatpush1.bf16.msra.mxu0 0
        %1285 = vmatprep.subr.bf16.mxu0 0
        %1286 = vmatpush1.bf16.msra.mxu0 0
        %1287 = vmatprep.subr.bf16.mxu0 0
        %1288 = vmatpush1.bf16.msra.mxu0 0
        %1289 = vmatprep.subr.bf16.mxu0 0
        %1290 = vmatpush1.bf16.msra.mxu0 0
        %1291 = vmatprep.subr.bf16.mxu0 0
        %1292 = vmatpush1.bf16.msra.mxu0 0
        %1293 = vmatprep.mubr.bf16.mxu0 0
        %1294 = vmatmul.mubr.bf16.gmra.mrb[0].mxu0 %v1256
        %v1295 = vpop.f32.mrb[0].mxu0
        %v1296 = vadd.f32 0.0, %v1295
        %v1297 = vpop.f32.mrb[0].mxu0
        %v1298 = vpop.f32.mrb[0].mxu0
        %v1299 = vpop.f32.mrb[0].mxu0
        %1300 = vdwg.mxu0
        %v1301 = vrcp.pop %v1098
        %v1302 = vrcp.pop %v1101
        %v1303 = vrcp.pop %v1104
        %v1304 = vrcp.pop %v1107
        %v1305 = vmul.f32 %v1158, %v1301
        %v1306 = vmul.f32 %v1204, %v1302
        %v1307 = vmul.f32 %v1250, %v1303
        %v1308 = vmul.f32 %v1296, %v1304
        %v1309 = vpack.c.bf16 %v1305, %v1305
        %v1310 = vpack.c.bf16 %v1306, %v1306
        %v1311 = vpack.c.bf16 %v1307, %v1307
        %v1312 = vpack.c.bf16 %v1308, %v1308
        %vm1313 = vcmask 60416
        %1314 = vst.msk [vmem:[#allocation5] sm:$0xf] %vm1313, %v1309
        %v1316 = vunpack.c.l.b16 %v1310
        %v1317 = vpack.c.b16 %v1316, %v1316
        %1318 = vrot.lane.b32.xlu0 %v1317, 8
        %v1319 = vpop.permute.xlu0 %1318
        %vm1321 = vcmask 126016
        %1322 = vst.msk [vmem:[#allocation5] sm:$0xf] %vm1321, %v1319
        %v1324 = vunpack.c.l.b16 %v1311
        %v1325 = vpack.c.b16 %v1324, %v1324
        %1326 = vrot.lane.b32.xlu0 %v1325, 16
        %v1327 = vpop.permute.xlu0 %1326
        %vm1329 = vcmask 191616
        %1330 = vst.msk [vmem:[#allocation5] sm:$0xf] %vm1329, %v1327
        %v1332 = vunpack.c.l.b16 %v1312
        %v1333 = vpack.c.b16 %v1332, %v1332
        %1334 = vrot.lane.b32.xlu0 %v1333, 24
        %v1335 = vpop.permute.xlu0 %1334
        %vm1337 = vcmask 257216
        %1338 = vst.msk [vmem:[#allocation5] sm:$0xf] %vm1337, %v1335
        %v1339 = vld [vmem:[#allocation5] sm:$0xf]
        %v1340 = vld [vmem:[#allocation14] sm:$0xf]
        %v1341 = vld [vmem:[#allocation14 + $0x4] sm:$0xf]
        %v1342 = vld [vmem:[#allocation14 + $0x8] sm:$0xf]
        %v1343 = vld [vmem:[#allocation14 + $0xc] sm:$0xf]
        %v1344 = vld [vmem:[#allocation15] sm:$0x1]
        %v1346 = vlaneseq
        %v1347 = vshrl.u32 %v1346, 7
        %v1348 = vsub.s32 0, %v1347
        %v1349 = vrot.slane %v1344, %v1348
        %v1355 = vunpack.c.l.b16 %v1340
        %v1356 = vunpack.c.l.b16 %v1341
        %v1357 = vunpack.c.l.b16 %v1342
        %v1358 = vunpack.c.l.b16 %v1343
        %v1359 = vpack.c.b16 %v1356, %v1355
        %v1360 = vpack.c.b16 %v1358, %v1357
        %vm1363 = vcmask 261120
        %v1365 = vsel %vm1363, %v1339, 0
        %1367 = vmatprep.subr.bf16.mxu0 0
        %1368 = vmatpush1.bf16.msra.mxu0 %v1359
        %1369 = vmatprep.subr.bf16.mxu0 0
        %1370 = vmatpush1.bf16.msra.mxu0 %v1360
        %1371 = vmatprep.subr.bf16.mxu0 0
        %1372 = vmatpush1.bf16.msra.mxu0 0
        %1373 = vmatprep.subr.bf16.mxu0 0
        %1374 = vmatpush1.bf16.msra.mxu0 0
        %1375 = vmatprep.subr.bf16.mxu0 0
        %1376 = vmatpush1.bf16.msra.mxu0 0
        %1377 = vmatprep.subr.bf16.mxu0 0
        %1378 = vmatpush1.bf16.msra.mxu0 0
        %1379 = vmatprep.subr.bf16.mxu0 0
        %1380 = vmatpush1.bf16.msra.mxu0 0
        %1381 = vmatprep.subr.bf16.mxu0 0
        %1382 = vmatpush1.bf16.msra.mxu0 0
        %1383 = vmatprep.subr.bf16.mxu0 0
        %1384 = vmatpush1.bf16.msra.mxu0 0
        %1385 = vmatprep.subr.bf16.mxu0 0
        %1386 = vmatpush1.bf16.msra.mxu0 0
        %1387 = vmatprep.subr.bf16.mxu0 0
        %1388 = vmatpush1.bf16.msra.mxu0 0
        %1389 = vmatprep.subr.bf16.mxu0 0
        %1390 = vmatpush1.bf16.msra.mxu0 0
        %1391 = vmatprep.subr.bf16.mxu0 0
        %1392 = vmatpush1.bf16.msra.mxu0 0
        %1393 = vmatprep.subr.bf16.mxu0 0
        %1394 = vmatpush1.bf16.msra.mxu0 0
        %1395 = vmatprep.subr.bf16.mxu0 0
        %1396 = vmatpush1.bf16.msra.mxu0 0
        %1397 = vmatprep.subr.bf16.mxu0 0
        %1398 = vmatpush1.bf16.msra.mxu0 0
        %1399 = vmatprep.mubr.bf16.mxu0 0
        %1400 = vmatmul.mubr.bf16.gmra.mrb[0].mxu0 %v1365
        %v1401 = vpop.f32.mrb[0].mxu0
        %v1402 = vadd.f32 %v1349, %v1401
        %v1403 = vpop.f32.mrb[0].mxu0
        %v1404 = vpop.f32.mrb[0].mxu0
        %v1405 = vpop.f32.mrb[0].mxu0
        %1406 = vdwg.mxu0
        %v1407 = vld [vmem:[%s600] sm:$0xff]
        %v1408 = vadd.f32 %v1402, %v1407
        %v1409 = vld [vmem:[#allocation17] sm:$0x1]
        %v1410 = vld [vmem:[#allocation18] sm:$0x1]
        %v1411 = vsel %vm1363, %v1408, 0.0
        %1412 = vadd.xlane.f32.xlu0 %v1411
        %v1413 = vpop.xlane.xlu0 %1412
        %v1414 = vrcp.pop 32.0
        %v1415 = vmul.f32 %v1413, %v1414
        %v1416 = vsub.f32 %v1408, %v1415
        %v1417 = vmul.f32 %v1416, %v1416
        %v1418 = vsel %vm1363, %v1417, 0.0
        %1419 = vadd.xlane.f32.xlu0 %v1418
        %v1420 = vpop.xlane.xlu0 %1419
        %v1421 = vmul.f32 %v1420, %v1414
        %v1422 = vadd.f32 %v1421, 1e-05
        %v1423 = vrsqrt.pop %v1422
        %v1424 = vmul.f32 %v1416, %v1423
        %v1426 = vlaneseq
        %v1427 = vshrl.u32 %v1426, 7
        %v1428 = vsub.s32 0, %v1427
        %v1429 = vrot.slane %v1409, %v1428
        %v1431 = vmul.f32 %v1424, %v1429
        %v1433 = vlaneseq
        %v1434 = vshrl.u32 %v1433, 7
        %v1435 = vsub.s32 0, %v1434
        %v1436 = vrot.slane %v1410, %v1435
        %v1438 = vadd.f32 %v1431, %v1436
        %v1439 = vpack.c.bf16 %v1438, %v1438
        %v1440 = vld [vmem:[#allocation20] sm:$0xf]
        %v1441 = vld [vmem:[#allocation20 + $0x4] sm:$0xf]
        %v1442 = vld [vmem:[#allocation20 + $0x8] sm:$0xf]
        %v1443 = vld [vmem:[#allocation20 + $0xc] sm:$0xf]
        %v1444 = vld [vmem:[#allocation21] sm:$0x1]
        %v1446 = vlaneseq
        %v1447 = vshrl.u32 %v1446, 7
        %v1448 = vsub.s32 0, %v1447
        %v1449 = vrot.slane %v1444, %v1448
        %v1455 = vunpack.c.l.b16 %v1440
        %v1456 = vunpack.c.l.b16 %v1441
        %v1457 = vunpack.c.l.b16 %v1442
        %v1458 = vunpack.c.l.b16 %v1443
        %v1459 = vpack.c.b16 %v1456, %v1455
        %v1460 = vpack.c.b16 %v1458, %v1457
        %v1464 = vsel %vm1363, %v1439, 0
        %1466 = vmatprep.subr.bf16.mxu0 0
        %1467 = vmatpush1.bf16.msra.mxu0 %v1459
        %1468 = vmatprep.subr.bf16.mxu0 0
        %1469 = vmatpush1.bf16.msra.mxu0 %v1460
        %1470 = vmatprep.subr.bf16.mxu0 0
        %1471 = vmatpush1.bf16.msra.mxu0 0
        %1472 = vmatprep.subr.bf16.mxu0 0
        %1473 = vmatpush1.bf16.msra.mxu0 0
        %1474 = vmatprep.subr.bf16.mxu0 0
        %1475 = vmatpush1.bf16.msra.mxu0 0
        %1476 = vmatprep.subr.bf16.mxu0 0
        %1477 = vmatpush1.bf16.msra.mxu0 0
        %1478 = vmatprep.subr.bf16.mxu0 0
        %1479 = vmatpush1.bf16.msra.mxu0 0
        %1480 = vmatprep.subr.bf16.mxu0 0
        %1481 = vmatpush1.bf16.msra.mxu0 0
        %1482 = vmatprep.subr.bf16.mxu0 0
        %1483 = vmatpush1.bf16.msra.mxu0 0
        %1484 = vmatprep.subr.bf16.mxu0 0
        %1485 = vmatpush1.bf16.msra.mxu0 0
        %1486 = vmatprep.subr.bf16.mxu0 0
        %1487 = vmatpush1.bf16.msra.mxu0 0
        %1488 = vmatprep.subr.bf16.mxu0 0
        %1489 = vmatpush1.bf16.msra.mxu0 0
        %1490 = vmatprep.subr.bf16.mxu0 0
        %1491 = vmatpush1.bf16.msra.mxu0 0
        %1492 = vmatprep.subr.bf16.mxu0 0
        %1493 = vmatpush1.bf16.msra.mxu0 0
        %1494 = vmatprep.subr.bf16.mxu0 0
        %1495 = vmatpush1.bf16.msra.mxu0 0
        %1496 = vmatprep.subr.bf16.mxu0 0
        %1497 = vmatpush1.bf16.msra.mxu0 0
        %1498 = vmatprep.mubr.bf16.mxu0 0
        %1499 = vmatmul.mubr.bf16.gmra.mrb[0].mxu0 %v1464
        %v1500 = vpop.f32.mrb[0].mxu0
        %v1501 = vadd.f32 %v1449, %v1500
        %v1502 = vpop.f32.mrb[0].mxu0
        %v1503 = vpop.f32.mrb[0].mxu0
        %v1504 = vpop.f32.mrb[0].mxu0
        %1505 = vdwg.mxu0
        %v1506 = vmax.f32 %v1501, 0.0
        %v1507 = vpack.c.bf16 %v1506, %v1506
        %v1508 = vld [vmem:[#allocation23] sm:$0xf]
        %v1509 = vld [vmem:[#allocation23 + $0x4] sm:$0xf]
        %v1510 = vld [vmem:[#allocation23 + $0x8] sm:$0xf]
        %v1511 = vld [vmem:[#allocation23 + $0xc] sm:$0xf]
        %v1512 = vld [vmem:[#allocation23 + $0x10] sm:$0xf]
        %v1513 = vld [vmem:[#allocation23 + $0x14] sm:$0xf]
        %v1514 = vld [vmem:[#allocation23 + $0x18] sm:$0xf]
        %v1515 = vld [vmem:[#allocation23 + $0x1c] sm:$0xf]
        %v1516 = vld [vmem:[#allocation23 + $0x20] sm:$0xf]
        %v1517 = vld [vmem:[#allocation23 + $0x24] sm:$0xf]
        %v1518 = vld [vmem:[#allocation23 + $0x28] sm:$0xf]
        %v1519 = vld [vmem:[#allocation23 + $0x2c] sm:$0xf]
        %v1520 = vld [vmem:[#allocation23 + $0x30] sm:$0xf]
        %v1521 = vld [vmem:[#allocation23 + $0x34] sm:$0xf]
        %v1522 = vld [vmem:[#allocation23 + $0x38] sm:$0xf]
        %v1523 = vld [vmem:[#allocation23 + $0x3c] sm:$0xf]
        %v1524 = vld [vmem:[#allocation24] sm:$0x1]
        %v1526 = vlaneseq
        %v1527 = vshrl.u32 %v1526, 7
        %v1528 = vsub.s32 0, %v1527
        %v1529 = vrot.slane %v1524, %v1528
        %v1547 = vunpack.c.l.b16 %v1508
        %v1548 = vunpack.c.l.b16 %v1509
        %v1549 = vunpack.c.l.b16 %v1510
        %v1550 = vunpack.c.l.b16 %v1511
        %v1551 = vunpack.c.l.b16 %v1512
        %v1552 = vunpack.c.l.b16 %v1513
        %v1553 = vunpack.c.l.b16 %v1514
        %v1554 = vunpack.c.l.b16 %v1515
        %v1555 = vunpack.c.l.b16 %v1516
        %v1556 = vunpack.c.l.b16 %v1517
        %v1557 = vunpack.c.l.b16 %v1518
        %v1558 = vunpack.c.l.b16 %v1519
        %v1559 = vunpack.c.l.b16 %v1520
        %v1560 = vunpack.c.l.b16 %v1521
        %v1561 = vunpack.c.l.b16 %v1522
        %v1562 = vunpack.c.l.b16 %v1523
        %v1563 = vpack.c.b16 %v1548, %v1547
        %v1564 = vpack.c.b16 %v1550, %v1549
        %v1565 = vpack.c.b16 %v1552, %v1551
        %v1566 = vpack.c.b16 %v1554, %v1553
        %v1567 = vpack.c.b16 %v1556, %v1555
        %v1568 = vpack.c.b16 %v1558, %v1557
        %v1569 = vpack.c.b16 %v1560, %v1559
        %v1570 = vpack.c.b16 %v1562, %v1561
        %1579 = vmatprep.subr.bf16.mxu0 0
        %1580 = vmatpush1.bf16.msra.mxu0 %v1563
        %1581 = vmatprep.subr.bf16.mxu0 0
        %1582 = vmatpush1.bf16.msra.mxu0 %v1564
        %1583 = vmatprep.subr.bf16.mxu0 0
        %1584 = vmatpush1.bf16.msra.mxu0 %v1565
        %1585 = vmatprep.subr.bf16.mxu0 0
        %1586 = vmatpush1.bf16.msra.mxu0 %v1566
        %1587 = vmatprep.subr.bf16.mxu0 0
        %1588 = vmatpush1.bf16.msra.mxu0 %v1567
        %1589 = vmatprep.subr.bf16.mxu0 0
        %1590 = vmatpush1.bf16.msra.mxu0 %v1568
        %1591 = vmatprep.subr.bf16.mxu0 0
        %1592 = vmatpush1.bf16.msra.mxu0 %v1569
        %1593 = vmatprep.subr.bf16.mxu0 0
        %1594 = vmatpush1.bf16.msra.mxu0 %v1570
        %1595 = vmatprep.subr.bf16.mxu0 0
        %1596 = vmatpush1.bf16.msra.mxu0 0
        %1597 = vmatprep.subr.bf16.mxu0 0
        %1598 = vmatpush1.bf16.msra.mxu0 0
        %1599 = vmatprep.subr.bf16.mxu0 0
        %1600 = vmatpush1.bf16.msra.mxu0 0
        %1601 = vmatprep.subr.bf16.mxu0 0
        %1602 = vmatpush1.bf16.msra.mxu0 0
        %1603 = vmatprep.subr.bf16.mxu0 0
        %1604 = vmatpush1.bf16.msra.mxu0 0
        %1605 = vmatprep.subr.bf16.mxu0 0
        %1606 = vmatpush1.bf16.msra.mxu0 0
        %1607 = vmatprep.subr.bf16.mxu0 0
        %1608 = vmatpush1.bf16.msra.mxu0 0
        %1609 = vmatprep.subr.bf16.mxu0 0
        %1610 = vmatpush1.bf16.msra.mxu0 0
        %1611 = vmatprep.mubr.bf16.mxu0 0
        %1612 = vmatmul.mubr.bf16.gmra.mrb[0].mxu0 %v1507
        %v1613 = vpop.f32.mrb[0].mxu0
        %v1614 = vadd.f32 %v1529, %v1613
        %v1615 = vpop.f32.mrb[0].mxu0
        %v1616 = vpop.f32.mrb[0].mxu0
        %v1617 = vpop.f32.mrb[0].mxu0
        %1618 = vdwg.mxu0
        %v1619 = vadd.f32 %v1614, %v1438
        %v1620 = vld [vmem:[#allocation26] sm:$0x1]
        %v1621 = vld [vmem:[#allocation27] sm:$0x1]
        %v1622 = vsel %vm1363, %v1619, 0.0
        %1623 = vadd.xlane.f32.xlu0 %v1622
        %v1624 = vpop.xlane.xlu0 %1623
        %v1625 = vmul.f32 %v1624, %v1414
        %v1626 = vsub.f32 %v1619, %v1625
        %v1627 = vmul.f32 %v1626, %v1626
        %v1628 = vsel %vm1363, %v1627, 0.0
        %1629 = vadd.xlane.f32.xlu0 %v1628
        %v1630 = vpop.xlane.xlu0 %1629
        %v1631 = vmul.f32 %v1630, %v1414
        %v1632 = vadd.f32 %v1631, 1e-05
        %v1633 = vrsqrt.pop %v1632
        %v1634 = vmul.f32 %v1626, %v1633
        %v1636 = vlaneseq
        %v1637 = vshrl.u32 %v1636, 7
        %v1638 = vsub.s32 0, %v1637
        %v1639 = vrot.slane %v1620, %v1638
        %v1641 = vmul.f32 %v1634, %v1639
        %v1643 = vlaneseq
        %v1644 = vshrl.u32 %v1643, 7
        %v1645 = vsub.s32 0, %v1644
        %v1646 = vrot.slane %v1621, %v1645
        %v1648 = vadd.f32 %v1641, %v1646
        %1649 = vst.msk [vmem:[%s714] sm:$0xff] %vm1363, %v1648
        %s1650 = sand.u32 %s373, 1
        %s1651 = scalar_lea.sflag [#allocation8], %s1650
        %s1652 = sand.u32 %s373, 1
        %s1653 = smul.addr %s1652, 8
        %s1654 = scalar_lea.vmem [#allocation29], %s1653
        // Predicated region
        $region137: #{encoder_forward.2} parent=75 // pred_check
          %p1655 = pneg %p383
        $region138: #{encoder_forward.2} parent=75 // pred_check_branch
          %1657 = sbr.rel (%p1655) target = $region140
        $region139: #{encoder_forward.2} parent=75 // pred_region
          %s1659 = ssub.s32 128, 128
          %1660 = vsyncadd %s1651, %s1659
          %s1661 = sadd.s32 %s45, %s44
          %s1662 = smul.addr %s1661, 128
          %s1663 = scalar_lea.hbm %s14, %s1662
          %s1665 = sshll.u32 %s1654, 4
          %s1666 = int_to_ptr.vmem [resolvable:$true] %s1665
          %1668 = dma.vmem_to_hbm [thread:$0]  %s1666, 128, %s1663, %s1651
        $region140: #{encoder_forward.2} parent=75 // pred_fallthru
          _
      $region76: #{encoder_forward.2} parent=5 // pred_fallthru
        _
      %p1669 = scmp.le.s32.totalorder 2, %s35
      // Predicated region
      $region141: #{encoder_forward.2} parent=5 // pred_check
        %p1670 = pneg %p1669
      $region142: #{encoder_forward.2} parent=5 // pred_check_branch
        %1672 = sbr.rel (%p1670) target = $region144
      $region143: #{encoder_forward.2} parent=5 // pred_region
        %s1673 = ssub.s32 %s35, 2
        // Predicated region
        $region145: #{encoder_forward.2} parent=143 // pred_check
          %p1674 = pneg %p389
        $region146: #{encoder_forward.2} parent=143 // pred_check_branch
          %1676 = sbr.rel (%p1674) target = $region148
        $region147: #{encoder_forward.2} parent=143 // pred_region
          %s1677 = sand.u32 %s374, 1
          %s1678 = scalar_lea.sflag [#allocation8], %s1677
          %s1679 = sand.u32 %s374, 1
          %s1680 = smul.addr %s1679, 8
          %s1681 = scalar_lea.vmem [#allocation29], %s1680
          %1682 = dma.done %s1678, 128
        $region148: #{encoder_forward.2} parent=143 // pred_fallthru
          _
      $region144: #{encoder_forward.2} parent=5 // pred_fallthru
        _
    $region6: #{encoder_forward.2} parent=1 // loop_footer
      %s39 = sadd.s32 1, %s35
    $region7: #{encoder_forward.2} parent=1 // loop_footer_branch
      %34 = sbr.rel target = $region3
    $region8: #{encoder_forward.2} parent=1 // loop_exit
      _
    %1683 = vsyncpa [#allocation7], 1
    %s1684 = scalar_lea.sflag [#allocation7], 1
    %1685 = vsyncpa %s1684, 1
    %1686 = vsyncpa [#allocation10], 1
    %s1687 = scalar_lea.sflag [#allocation10], 1
    %1688 = vsyncpa %s1687, 1
    %1689 = vsyncpa [#allocation13], 1
    %1690 = vsyncpa [#allocation16], 1
    %1691 = vsyncpa [#allocation19], 1
    %1692 = vsyncpa [#allocation22], 1
    %1693 = vsyncpa [#allocation25], 1
    %1694 = vsyncpa [#allocation28], 1
    %1695 = vsyncpa [#allocation8], 1
    %s1696 = scalar_lea.sflag [#allocation8], 1
    %1697 = vsyncpa %s1696, 1

</llo_original>
